<compile_context>
chip_gen: v5e
topology: v5e:2x2
jax: 0.10.0
libtpu: 0.0.40
codegen_flags: <defaults>
</compile_context>

<pallas_src>
import functools
import math

import jax
import jax.numpy as jnp
from jax.experimental import pallas as pl
from jax.experimental.pallas import tpu as pltpu


def _qkv_attention_kernel(x_ref, wq_ref, bq_ref, wk_ref, bk_ref, wv_ref, bv_ref,
                          wp_ref, bp_ref, out_ref, att_ref, *, n_heads, scale):
    x = x_ref[0]                                                      # (S, D)
    q = jnp.dot(x, wq_ref[...], preferred_element_type=jnp.float32) + bq_ref[...]
    k = jnp.dot(x, wk_ref[...], preferred_element_type=jnp.float32) + bk_ref[...]
    v = jnp.dot(x, wv_ref[...], preferred_element_type=jnp.float32) + bv_ref[...]
    proj_dim = q.shape[-1]
    hd = proj_dim // n_heads

    out_acc = None
    for h in range(n_heads):                       # static (unrolled) head loop
        lo = h * hd
        qh = q[:, lo:lo + hd]                      # (S, hd)
        kh = k[:, lo:lo + hd]
        vh = v[:, lo:lo + hd]
        # s[i, j] = sum_d qh[i, d] * kh[j, d]  (contract feature dim, no transpose)
        s = jax.lax.dot_general(qh, kh, (((1,), (1,)), ((), ())),
                                preferred_element_type=jnp.float32) * scale
        s = s - jnp.max(s, axis=-1, keepdims=True)
        e = jnp.exp(s)
        att_h = e / jnp.sum(e, axis=-1, keepdims=True)                # (S, S)
        att_ref[0, h, :, :] = att_h.astype(att_ref.dtype)
        yh = jnp.dot(att_h, vh, preferred_element_type=jnp.float32)   # (S, hd)
        # proj(concat_h yh) == sum_h yh @ Wp[h*hd:(h+1)*hd, :]
        contrib = jnp.dot(yh, wp_ref[lo:lo + hd, :],
                          preferred_element_type=jnp.float32)
        out_acc = contrib if out_acc is None else out_acc + contrib
    out_ref[0, :, :] = (out_acc + bp_ref[...]).astype(out_ref.dtype)


def qkv_attention(x, wq, bq, wk, bk, wv, bv, wp, bp, *, n_heads, scale):
    """x: (B, S, D); weights pre-transposed to (in, out); biases shaped (1, out)."""
    B, S, D = x.shape
    P = wq.shape[1]
    assert P % n_heads == 0
    kernel = functools.partial(_qkv_attention_kernel, n_heads=n_heads, scale=scale)
    full = lambda b: (0, 0)   # weights/biases: same full block every grid step
    return pl.pallas_call(
        kernel,
        out_shape=(
            jax.ShapeDtypeStruct((B, S, D), x.dtype),
            jax.ShapeDtypeStruct((B, n_heads, S, S), x.dtype),
        ),
        grid_spec=pltpu.PrefetchScalarGridSpec(
            num_scalar_prefetch=0,
            grid=(B,),
            in_specs=[
                pl.BlockSpec((1, S, D), lambda b: (b, 0, 0)),
                pl.BlockSpec((D, P), full), pl.BlockSpec((1, P), full),
                pl.BlockSpec((D, P), full), pl.BlockSpec((1, P), full),
                pl.BlockSpec((D, P), full), pl.BlockSpec((1, P), full),
                pl.BlockSpec((P, D), full), pl.BlockSpec((1, D), full),
            ],
            out_specs=[
                pl.BlockSpec((1, S, D), lambda b: (b, 0, 0)),
                pl.BlockSpec((1, n_heads, S, S), lambda b: (b, 0, 0, 0)),
            ],
        ),
        compiler_params=pltpu.CompilerParams(
            dimension_semantics=("parallel",),
        ),
    )(x, wq, bq, wk, bk, wv, bv, wp, bp)


class QKVAttention:
    """JAX/Pallas port of the PyTorch module (deterministic synthetic init)."""

    def __init__(self, piece_dim: int, n_heads: int = 1, proj_dim=None, key=None):
        if proj_dim is None:
            proj_dim = piece_dim
        assert proj_dim % n_heads == 0
        if key is None:
            key = jax.random.PRNGKey(0)
        ks = jax.random.split(key, 8)

        def linear(kw, kb, fan_in, fan_out):
            # nn.Linear default init: U(-1/sqrt(fan_in), 1/sqrt(fan_in))
            bound = 1.0 / math.sqrt(fan_in)
            w = jax.random.uniform(kw, (fan_in, fan_out), jnp.float32, -bound, bound)
            b = jax.random.uniform(kb, (1, fan_out), jnp.float32, -bound, bound)
            return w, b  # weight stored (in, out): kernel computes x @ w

        self.wq, self.bq = linear(ks[0], ks[1], piece_dim, proj_dim)
        self.wk, self.bk = linear(ks[2], ks[3], piece_dim, proj_dim)
        self.wv, self.bv = linear(ks[4], ks[5], piece_dim, proj_dim)
        self.wp, self.bp = linear(ks[6], ks[7], proj_dim, piece_dim)
        self.n_heads = n_heads
        self.scale = 1.0 / math.sqrt(proj_dim // n_heads)

    def __call__(self, x):
        return qkv_attention(x, self.wq, self.bq, self.wk, self.bk,
                             self.wv, self.bv, self.wp, self.bp,
                             n_heads=self.n_heads, scale=self.scale)


def reference_forward(m, x):
    """Pure-JAX reference matching the PyTorch forward."""
    hp = jax.lax.Precision.HIGHEST
    q = jnp.einsum('bsd,dp->bsp', x, m.wq, precision=hp) + m.bq[0]
    k = jnp.einsum('bsd,dp->bsp', x, m.wk, precision=hp) + m.bk[0]
    v = jnp.einsum('bsd,dp->bsp', x, m.wv, precision=hp) + m.bv[0]
    B, S, P = q.shape
    n, h = m.n_heads, P // m.n_heads
    q = q.reshape(B, S, n, h).transpose(0, 2, 1, 3)
    k = k.reshape(B, S, n, h).transpose(0, 2, 1, 3)
    v = v.reshape(B, S, n, h).transpose(0, 2, 1, 3)
    s = jnp.einsum('bnsh,bnth->bnst', q, k, precision=hp) * m.scale
    att = jax.nn.softmax(s, axis=-1)
    y = jnp.einsum('bnst,bnth->bnsh', att, v, precision=hp)
    y = y.transpose(0, 2, 1, 3).reshape(B, S, P)
    out = jnp.einsum('bsp,pd->bsd', y, m.wp, precision=hp) + m.bp[0]
    return out, att


if __name__ == "__main__":
    # Small but lane-dense shapes (last dims multiples of 128 -> unmasked stores).
    piece_dim = 128
    proj_dim = 128
    n_heads = 2
    seq = 128
    batch = 2

    key = jax.random.PRNGKey(0)
    k_x, k_mod = jax.random.split(key)
    module = QKVAttention(piece_dim, n_heads=n_heads, proj_dim=proj_dim, key=k_mod)
    x = jax.random.normal(k_x, (batch, seq, piece_dim), dtype=jnp.float32)

    out, att = module(x)
    jax.block_until_ready(out)
    jax.block_until_ready(att)

    ref_out, ref_att = reference_forward(module, x)
    assert out.shape == (batch, seq, piece_dim) and out.dtype == x.dtype
    assert att.shape == (batch, n_heads, seq, seq)
    # tolerance accounts for MXU f32 multi-pass vs XLA HIGHEST-precision reference
    assert jnp.allclose(att, ref_att, atol=1e-2, rtol=1e-2), \
        float(jnp.max(jnp.abs(att - ref_att)))
    assert jnp.allclose(out, ref_out, atol=1e-2, rtol=1e-2), \
        float(jnp.max(jnp.abs(out - ref_out)))

    print("KERNEL_OK")
</pallas_src>

<mosaic_0001>
module attributes {stable_mosaic.version = 11 : i64} {
  func.func @_qkv_attention_kernel(%arg0: i32, %arg1: memref<1x128x128xf32, #tpu.memory_space<vmem>>, %arg2: memref<128x128xf32, #tpu.memory_space<vmem>>, %arg3: memref<1x128xf32, #tpu.memory_space<vmem>>, %arg4: memref<128x128xf32, #tpu.memory_space<vmem>>, %arg5: memref<1x128xf32, #tpu.memory_space<vmem>>, %arg6: memref<128x128xf32, #tpu.memory_space<vmem>>, %arg7: memref<1x128xf32, #tpu.memory_space<vmem>>, %arg8: memref<128x128xf32, #tpu.memory_space<vmem>>, %arg9: memref<1x128xf32, #tpu.memory_space<vmem>>, %arg10: memref<1x128x128xf32, #tpu.memory_space<vmem>>, %arg11: memref<1x2x128x128xf32, #tpu.memory_space<vmem>>) attributes {dimension_semantics = [#tpu.dimension_semantics<parallel>], iteration_bounds = array<i64: 2>, scalar_prefetch = 0 : i64, scratch_operands = 0 : i64, tpu.core_type = #tpu.core_type<tc>, window_params = [{transform_indices = @transform_0, window_bounds = array<i64: 1, 128, 128>}, {pipeline_mode = #tpu.pipeline_mode<synchronous>, transform_indices = @transform_1, window_bounds = array<i64: 128, 128>}, {pipeline_mode = #tpu.pipeline_mode<synchronous>, transform_indices = @transform_2, window_bounds = array<i64: 1, 128>}, {pipeline_mode = #tpu.pipeline_mode<synchronous>, transform_indices = @transform_3, window_bounds = array<i64: 128, 128>}, {pipeline_mode = #tpu.pipeline_mode<synchronous>, transform_indices = @transform_4, window_bounds = array<i64: 1, 128>}, {pipeline_mode = #tpu.pipeline_mode<synchronous>, transform_indices = @transform_5, window_bounds = array<i64: 128, 128>}, {pipeline_mode = #tpu.pipeline_mode<synchronous>, transform_indices = @transform_6, window_bounds = array<i64: 1, 128>}, {pipeline_mode = #tpu.pipeline_mode<synchronous>, transform_indices = @transform_7, window_bounds = array<i64: 128, 128>}, {pipeline_mode = #tpu.pipeline_mode<synchronous>, transform_indices = @transform_8, window_bounds = array<i64: 1, 128>}, {transform_indices = @transform_9, window_bounds = array<i64: 1, 128, 128>}, {transform_indices = @transform_10, window_bounds = array<i64: 1, 2, 128, 128>}]} {
    %c0 = arith.constant 0 : index
    %c0_0 = arith.constant 0 : index
    %c0_1 = arith.constant 0 : index
    %0 = vector.load %arg1[%c0, %c0_0, %c0_1] : memref<1x128x128xf32, #tpu.memory_space<vmem>>, vector<1x128x128xf32>
    %1 = vector.shape_cast %0 : vector<1x128x128xf32> to vector<128x128xf32>
    %c0_2 = arith.constant 0 : index
    %c0_3 = arith.constant 0 : index
    %2 = vector.load %arg2[%c0_2, %c0_3] : memref<128x128xf32, #tpu.memory_space<vmem>>, vector<128x128xf32>
    %cst = arith.constant dense<0.000000e+00> : vector<128x128xf32>
    %3 = tpu.matmul %1, %2, %cst {dimension_numbers = #tpu.dot_dimension_numbers<[1], [0], [0], [1], [0, 0, 1, 1], [], []>} : vector<128x128xf32>, vector<128x128xf32>, vector<128x128xf32> -> vector<128x128xf32>
    %c0_4 = arith.constant 0 : index
    %c0_5 = arith.constant 0 : index
    %4 = vector.load %arg3[%c0_4, %c0_5] : memref<1x128xf32, #tpu.memory_space<vmem>>, vector<1x128xf32>
    %5 = vector.broadcast %4 : vector<1x128xf32> to vector<128x128xf32>
    %6 = arith.addf %3, %5 : vector<128x128xf32>
    %c0_6 = arith.constant 0 : index
    %c0_7 = arith.constant 0 : index
    %7 = vector.load %arg4[%c0_6, %c0_7] : memref<128x128xf32, #tpu.memory_space<vmem>>, vector<128x128xf32>
    %cst_8 = arith.constant dense<0.000000e+00> : vector<128x128xf32>
    %8 = tpu.matmul %1, %7, %cst_8 {dimension_numbers = #tpu.dot_dimension_numbers<[1], [0], [0], [1], [0, 0, 1, 1], [], []>} : vector<128x128xf32>, vector<128x128xf32>, vector<128x128xf32> -> vector<128x128xf32>
    %c0_9 = arith.constant 0 : index
    %c0_10 = arith.constant 0 : index
    %9 = vector.load %arg5[%c0_9, %c0_10] : memref<1x128xf32, #tpu.memory_space<vmem>>, vector<1x128xf32>
    %10 = vector.broadcast %9 : vector<1x128xf32> to vector<128x128xf32>
    %11 = arith.addf %8, %10 : vector<128x128xf32>
    %c0_11 = arith.constant 0 : index
    %c0_12 = arith.constant 0 : index
    %12 = vector.load %arg6[%c0_11, %c0_12] : memref<128x128xf32, #tpu.memory_space<vmem>>, vector<128x128xf32>
    %cst_13 = arith.constant dense<0.000000e+00> : vector<128x128xf32>
    %13 = tpu.matmul %1, %12, %cst_13 {dimension_numbers = #tpu.dot_dimension_numbers<[1], [0], [0], [1], [0, 0, 1, 1], [], []>} : vector<128x128xf32>, vector<128x128xf32>, vector<128x128xf32> -> vector<128x128xf32>
    %c0_14 = arith.constant 0 : index
    %c0_15 = arith.constant 0 : index
    %14 = vector.load %arg7[%c0_14, %c0_15] : memref<1x128xf32, #tpu.memory_space<vmem>>, vector<1x128xf32>
    %15 = vector.broadcast %14 : vector<1x128xf32> to vector<128x128xf32>
    %16 = arith.addf %13, %15 : vector<128x128xf32>
    %17 = vector.extract_strided_slice %6 {offsets = [0, 0], sizes = [128, 64], strides = [1, 1]} : vector<128x128xf32> to vector<128x64xf32>
    %18 = vector.extract_strided_slice %11 {offsets = [0, 0], sizes = [128, 64], strides = [1, 1]} : vector<128x128xf32> to vector<128x64xf32>
    %19 = vector.extract_strided_slice %16 {offsets = [0, 0], sizes = [128, 64], strides = [1, 1]} : vector<128x128xf32> to vector<128x64xf32>
    %cst_16 = arith.constant dense<0.000000e+00> : vector<128x128xf32>
    %20 = tpu.matmul %17, %18, %cst_16 {dimension_numbers = #tpu.dot_dimension_numbers<[1], [1], [0], [0], [0, 0, 1, 0], [], []>} : vector<128x64xf32>, vector<128x64xf32>, vector<128x128xf32> -> vector<128x128xf32>
    %cst_17 = arith.constant 1.250000e-01 : f32
    %21 = vector.broadcast %cst_17 : f32 to vector<128x128xf32>
    %22 = arith.mulf %20, %21 : vector<128x128xf32>
    %cst_18 = arith.constant dense<0xFF800000> : vector<128xf32>
    %23 = vector.multi_reduction <maximumf>, %22, %cst_18 [1] : vector<128x128xf32> to vector<128xf32>
    %24 = vector.shape_cast %23 : vector<128xf32> to vector<128x1xf32>
    %25 = vector.broadcast %24 : vector<128x1xf32> to vector<128x128xf32>
    %26 = arith.subf %22, %25 : vector<128x128xf32>
    %27 = math.exp %26 : vector<128x128xf32>
    %cst_19 = arith.constant dense<0.000000e+00> : vector<128xf32>
    %28 = vector.multi_reduction <add>, %27, %cst_19 [1] : vector<128x128xf32> to vector<128xf32>
    %29 = vector.shape_cast %28 : vector<128xf32> to vector<128x1xf32>
    %30 = vector.broadcast %29 : vector<128x1xf32> to vector<128x128xf32>
    %31 = arith.divf %27, %30 : vector<128x128xf32>
    %c0_20 = arith.constant 0 : index
    %c0_21 = arith.constant 0 : index
    %c0_22 = arith.constant 0 : index
    %c0_23 = arith.constant 0 : index
    %32 = vector.load %arg11[%c0_20, %c0_21, %c0_22, %c0_23] : memref<1x2x128x128xf32, #tpu.memory_space<vmem>>, vector<1x1x128x128xf32>
    %33 = vector.shape_cast %32 : vector<1x1x128x128xf32> to vector<128x128xf32>
    %34 = vector.shape_cast %31 : vector<128x128xf32> to vector<1x1x128x128xf32>
    tpu.vector_store %arg11[%c0_20, %c0_21, %c0_22, %c0_23], %34 {strides = array<i32>} : memref<1x2x128x128xf32, #tpu.memory_space<vmem>>, vector<1x1x128x128xf32>,
    %cst_24 = arith.constant dense<0.000000e+00> : vector<128x64xf32>
    %35 = tpu.matmul %31, %19, %cst_24 {dimension_numbers = #tpu.dot_dimension_numbers<[1], [0], [0], [1], [0, 0, 1, 1], [], []>} : vector<128x128xf32>, vector<128x64xf32>, vector<128x64xf32> -> vector<128x64xf32>
    %c0_25 = arith.constant 0 : index
    %c0_26 = arith.constant 0 : index
    %36 = vector.load %arg8[%c0_25, %c0_26] : memref<128x128xf32, #tpu.memory_space<vmem>>, vector<64x128xf32>
    %cst_27 = arith.constant dense<0.000000e+00> : vector<128x128xf32>
    %37 = tpu.matmul %35, %36, %cst_27 {dimension_numbers = #tpu.dot_dimension_numbers<[1], [0], [0], [1], [0, 0, 1, 1], [], []>} : vector<128x64xf32>, vector<64x128xf32>, vector<128x128xf32> -> vector<128x128xf32>
    %38 = vector.extract_strided_slice %6 {offsets = [0, 64], sizes = [128, 64], strides = [1, 1]} : vector<128x128xf32> to vector<128x64xf32>
    %39 = vector.extract_strided_slice %11 {offsets = [0, 64], sizes = [128, 64], strides = [1, 1]} : vector<128x128xf32> to vector<128x64xf32>
    %40 = vector.extract_strided_slice %16 {offsets = [0, 64], sizes = [128, 64], strides = [1, 1]} : vector<128x128xf32> to vector<128x64xf32>
    %cst_28 = arith.constant dense<0.000000e+00> : vector<128x128xf32>
    %41 = tpu.matmul %38, %39, %cst_28 {dimension_numbers = #tpu.dot_dimension_numbers<[1], [1], [0], [0], [0, 0, 1, 0], [], []>} : vector<128x64xf32>, vector<128x64xf32>, vector<128x128xf32> -> vector<128x128xf32>
    %cst_29 = arith.constant 1.250000e-01 : f32
    %42 = vector.broadcast %cst_29 : f32 to vector<128x128xf32>
    %43 = arith.mulf %41, %42 : vector<128x128xf32>
    %cst_30 = arith.constant dense<0xFF800000> : vector<128xf32>
    %44 = vector.multi_reduction <maximumf>, %43, %cst_30 [1] : vector<128x128xf32> to vector<128xf32>
    %45 = vector.shape_cast %44 : vector<128xf32> to vector<128x1xf32>
    %46 = vector.broadcast %45 : vector<128x1xf32> to vector<128x128xf32>
    %47 = arith.subf %43, %46 : vector<128x128xf32>
    %48 = math.exp %47 : vector<128x128xf32>
    %cst_31 = arith.constant dense<0.000000e+00> : vector<128xf32>
    %49 = vector.multi_reduction <add>, %48, %cst_31 [1] : vector<128x128xf32> to vector<128xf32>
    %50 = vector.shape_cast %49 : vector<128xf32> to vector<128x1xf32>
    %51 = vector.broadcast %50 : vector<128x1xf32> to vector<128x128xf32>
    %52 = arith.divf %48, %51 : vector<128x128xf32>
    %c0_32 = arith.constant 0 : index
    %c1 = arith.constant 1 : index
    %c0_33 = arith.constant 0 : index
    %c0_34 = arith.constant 0 : index
    %53 = vector.load %arg11[%c0_32, %c1, %c0_33, %c0_34] : memref<1x2x128x128xf32, #tpu.memory_space<vmem>>, vector<1x1x128x128xf32>
    %54 = vector.shape_cast %53 : vector<1x1x128x128xf32> to vector<128x128xf32>
    %55 = vector.shape_cast %52 : vector<128x128xf32> to vector<1x1x128x128xf32>
    tpu.vector_store %arg11[%c0_32, %c1, %c0_33, %c0_34], %55 {strides = array<i32>} : memref<1x2x128x128xf32, #tpu.memory_space<vmem>>, vector<1x1x128x128xf32>,
    %cst_35 = arith.constant dense<0.000000e+00> : vector<128x64xf32>
    %56 = tpu.matmul %52, %40, %cst_35 {dimension_numbers = #tpu.dot_dimension_numbers<[1], [0], [0], [1], [0, 0, 1, 1], [], []>} : vector<128x128xf32>, vector<128x64xf32>, vector<128x64xf32> -> vector<128x64xf32>
    %c64 = arith.constant 64 : index
    %c0_36 = arith.constant 0 : index
    %57 = vector.load %arg8[%c64, %c0_36] : memref<128x128xf32, #tpu.memory_space<vmem>>, vector<64x128xf32>
    %cst_37 = arith.constant dense<0.000000e+00> : vector<128x128xf32>
    %58 = tpu.matmul %56, %57, %cst_37 {dimension_numbers = #tpu.dot_dimension_numbers<[1], [0], [0], [1], [0, 0, 1, 1], [], []>} : vector<128x64xf32>, vector<64x128xf32>, vector<128x128xf32> -> vector<128x128xf32>
    %59 = arith.addf %37, %58 : vector<128x128xf32>
    %c0_38 = arith.constant 0 : index
    %c0_39 = arith.constant 0 : index
    %60 = vector.load %arg9[%c0_38, %c0_39] : memref<1x128xf32, #tpu.memory_space<vmem>>, vector<1x128xf32>
    %61 = vector.broadcast %60 : vector<1x128xf32> to vector<128x128xf32>
    %62 = arith.addf %59, %61 : vector<128x128xf32>
    %c0_40 = arith.constant 0 : index
    %c0_41 = arith.constant 0 : index
    %c0_42 = arith.constant 0 : index
    %63 = vector.load %arg10[%c0_40, %c0_41, %c0_42] : memref<1x128x128xf32, #tpu.memory_space<vmem>>, vector<1x128x128xf32>
    %64 = vector.shape_cast %63 : vector<1x128x128xf32> to vector<128x128xf32>
    %65 = vector.shape_cast %62 : vector<128x128xf32> to vector<1x128x128xf32>
    tpu.vector_store %arg10[%c0_40, %c0_41, %c0_42], %65 {strides = array<i32>} : memref<1x128x128xf32, #tpu.memory_space<vmem>>, vector<1x128x128xf32>,
    return
  }
  func.func @transform_0(%arg0: i32) -> (i32, i32, i32) {
    %c0_i32 = arith.constant 0 : i32
    %c0_i32_0 = arith.constant 0 : i32
    %c0_i32_1 = arith.constant 0 : i32
    return %arg0, %c0_i32, %c0_i32_0 : i32, i32, i32
  }
  func.func @transform_1(%arg0: i32) -> (i32, i32) {
    %c0_i32 = arith.constant 0 : i32
    %c0_i32_0 = arith.constant 0 : i32
    %c0_i32_1 = arith.constant 0 : i32
    return %c0_i32, %c0_i32_0 : i32, i32
  }
  func.func @transform_2(%arg0: i32) -> (i32, i32) {
    %c0_i32 = arith.constant 0 : i32
    %c0_i32_0 = arith.constant 0 : i32
    %c0_i32_1 = arith.constant 0 : i32
    return %c0_i32, %c0_i32_0 : i32, i32
  }
  func.func @transform_3(%arg0: i32) -> (i32, i32) {
    %c0_i32 = arith.constant 0 : i32
    %c0_i32_0 = arith.constant 0 : i32
    %c0_i32_1 = arith.constant 0 : i32
    return %c0_i32, %c0_i32_0 : i32, i32
  }
  func.func @transform_4(%arg0: i32) -> (i32, i32) {
    %c0_i32 = arith.constant 0 : i32
    %c0_i32_0 = arith.constant 0 : i32
    %c0_i32_1 = arith.constant 0 : i32
    return %c0_i32, %c0_i32_0 : i32, i32
  }
  func.func @transform_5(%arg0: i32) -> (i32, i32) {
    %c0_i32 = arith.constant 0 : i32
    %c0_i32_0 = arith.constant 0 : i32
    %c0_i32_1 = arith.constant 0 : i32
    return %c0_i32, %c0_i32_0 : i32, i32
  }
  func.func @transform_6(%arg0: i32) -> (i32, i32) {
    %c0_i32 = arith.constant 0 : i32
    %c0_i32_0 = arith.constant 0 : i32
    %c0_i32_1 = arith.constant 0 : i32
    return %c0_i32, %c0_i32_0 : i32, i32
  }
  func.func @transform_7(%arg0: i32) -> (i32, i32) {
    %c0_i32 = arith.constant 0 : i32
    %c0_i32_0 = arith.constant 0 : i32
    %c0_i32_1 = arith.constant 0 : i32
    return %c0_i32, %c0_i32_0 : i32, i32
  }
  func.func @transform_8(%arg0: i32) -> (i32, i32) {
    %c0_i32 = arith.constant 0 : i32
    %c0_i32_0 = arith.constant 0 : i32
    %c0_i32_1 = arith.constant 0 : i32
    return %c0_i32, %c0_i32_0 : i32, i32
  }
  func.func @transform_9(%arg0: i32) -> (i32, i32, i32) {
    %c0_i32 = arith.constant 0 : i32
    %c0_i32_0 = arith.constant 0 : i32
    %c0_i32_1 = arith.constant 0 : i32
    return %arg0, %c0_i32, %c0_i32_0 : i32, i32, i32
  }
  func.func @transform_10(%arg0: i32) -> (i32, i32, i32, i32) {
    %c0_i32 = arith.constant 0 : i32
    %c0_i32_0 = arith.constant 0 : i32
    %c0_i32_1 = arith.constant 0 : i32
    %c0_i32_2 = arith.constant 0 : i32
    return %arg0, %c0_i32, %c0_i32_0, %c0_i32_1 : i32, i32, i32, i32
  }
}

</mosaic_0001>

<llo_original>
// kernel: tpu_custom_call.1
$region0: #{tpu_custom_call.1}
  #allocation0 [shape = 'u32[]', space=smem, size = 0x4, offset = 0x4, fixed_abs, tag = 'smem constant byte address 0x4 - core index']
  #allocation1 [shape = 'u32[72,128]{1,0:T(1,128)}', space=vmem, size = 0x9000, scoped, tag = 'internal scratch']
  %s0 = inlined_call_operand.hbm [shape: f32[2,128,128], index: 0, kind: input, shape index: {}]
  %s1 = inlined_call_operand.hbm [shape: f32[128,128], index: 1, kind: input, shape index: {}]
  %s2 = inlined_call_operand.vmem [shape: f32[1,128], index: 2, kind: input, shape index: {}]
  %s3 = inlined_call_operand.hbm [shape: f32[128,128], index: 3, kind: input, shape index: {}]
  %s4 = inlined_call_operand.vmem [shape: f32[1,128], index: 4, kind: input, shape index: {}]
  %s5 = inlined_call_operand.hbm [shape: f32[128,128], index: 5, kind: input, shape index: {}]
  %s6 = inlined_call_operand.vmem [shape: f32[1,128], index: 6, kind: input, shape index: {}]
  %s7 = inlined_call_operand.hbm [shape: f32[128,128], index: 7, kind: input, shape index: {}]
  %s8 = inlined_call_operand.vmem [shape: f32[1,128], index: 8, kind: input, shape index: {}]
  %s9 = inlined_call_operand.hbm [shape: f32[2,128,128], index: 9, kind: output, shape index: {0}]
  %s10 = inlined_call_operand.hbm [shape: f32[2,2,128,128], index: 10, kind: output, shape index: {1}]
  %11 = xla_tuple %s9, %s10
  %s12 = sld [smem:[#allocation0]]
  $region97: #{tpu_custom_call.1} parent=0
    _
  %s14 = ssub.s32 1, %s12
  %s15 = scalar_select 0, %s14, %s12
  $region1: #{tpu_custom_call.1} parent=0
    #allocation2 [shape = 'u8[131072]{0}', space=vmem, size = 0x20000, scoped, tag = 'input window, operand 0']
    #allocation3 [shape = 's32[2]{0}', space=sflag, size = 0x8, scoped, tag = 'scoped memory for tpu_custom_call.1']
    #allocation4 [shape = 's32[2]{0}', space=sflag, size = 0x8, scoped, tag = 'scoped memory for tpu_custom_call.1']
    #allocation5 [shape = 'u8[65536]{0}', space=vmem, size = 0x10000, scoped, tag = 'input window, operand 1, single buffered']
    #allocation6 [shape = 's32[1]{0}', space=sflag, size = 0x4, scoped, tag = 'scoped memory for tpu_custom_call.1']
    #allocation7 [shape = 'u8[65536]{0}', space=vmem, size = 0x10000, scoped, tag = 'input window, operand 3, single buffered']
    #allocation8 [shape = 'u8[65536]{0}', space=vmem, size = 0x10000, scoped, tag = 'input window, operand 5, single buffered']
    #allocation9 [shape = 's32[1]{0}', space=sflag, size = 0x4, scoped, tag = 'scoped memory for tpu_custom_call.1']
    #allocation10 [shape = 'u8[65536]{0}', space=vmem, size = 0x10000, scoped, tag = 'input window, operand 7, single buffered']
    #allocation11 [shape = 'u8[131072]{0}', space=vmem, size = 0x20000, scoped, tag = 'output window, operand 0']
    #allocation12 [shape = 'u8[262144]{0}', space=vmem, size = 0x40000, scoped, tag = 'output window, operand 1']
    #allocation13 [shape = 's32[2]{0}', space=sflag, size = 0x8, scoped, tag = 'scoped memory for tpu_custom_call.1']
    %16 = vsyncpa [#allocation3], 0
    %s17 = scalar_lea.sflag [#allocation3], 1
    %18 = vsyncpa %s17, 0
    %19 = vsyncpa [#allocation6], 0
    %20 = vsyncpa [#allocation9], 0
    %21 = vsyncpa [#allocation4], 0
    %s22 = scalar_lea.sflag [#allocation4], 1
    %23 = vsyncpa %s22, 0
    %24 = vsyncpa [#allocation13], 0
    %s25 = scalar_lea.sflag [#allocation13], 1
    %26 = vsyncpa %s25, 0
    loop: start=0, step=1, limit=4
    $region2: #{tpu_custom_call.1} parent=1 // loop_pre_header
      _
    $region3: #{tpu_custom_call.1} parent=1 // loop_header
      %s28 = sphi 0, %s32
      %p29 = scmp.ge.s32.totalorder %s28, 4
      %s38 = sphi 0, %s40
      %s41 = sphi 0, %s38
      %s42 = sphi 0, %s41
      %s58 = sphi 0, %s42
      %s62 = sphi 0, %s62
      %s64 = sphi 0, %s62
      %s65 = sphi 0, %s64
      %s79 = sphi 0, %s65
      %s83 = sphi 0, %s83
      %s85 = sphi 0, %s83
      %s86 = sphi 0, %s85
      %s100 = sphi 0, %s86
      %s104 = sphi 0, %s104
      %s106 = sphi 0, %s104
      %s107 = sphi 0, %s106
      %s121 = sphi 0, %s107
      %s125 = sphi 0, %s125
      %s127 = sphi 0, %s125
      %s128 = sphi 0, %s127
      %s142 = sphi 0, %s128
      %s146 = sphi 0, %s146
      %s148 = sphi 0, %s146
      %s149 = sphi 0, %s148
      %s163 = sphi 0, %s149
      %s167 = sphi 0, %s167
      %s169 = sphi 0, %s167
      %s170 = sphi 0, %s169
      %s184 = sphi 0, %s170
      %s188 = sphi 0, %s188
      %s190 = sphi 0, %s188
      %s191 = sphi 0, %s190
      %s205 = sphi 0, %s191
      %s209 = sphi 0, %s209
      %s211 = sphi 0, %s209
      %s212 = sphi 0, %s211
      %s226 = sphi 0, %s212
      %s232 = sphi 0, %s234
      %s235 = sphi 0, %s232
      %s236 = sphi 0, %s235
      %s252 = sphi 0, %s236
      %s258 = sphi 0, %s260
      %s261 = sphi 0, %s258
      %s262 = sphi 0, %s261
      %s278 = sphi 0, %s262
    $region4: #{tpu_custom_call.1} parent=1 // loop_header_branch
      %31 = sbr.rel (%p29) target = $region8
    $region5: #{tpu_custom_call.1} parent=1 // loop_body
      %s33 = ssub.s32 %s28, 1
      %s34 = ssub.s32 %s28, 2
      %s35 = sadd.s32 %s28, 1
      %s36 = ssub.s32 %s28, %s35
      %p37 = scmp.eq.s32.totalorder %s36, 0
      %s39 = sadd.s32 %s38, 1
      %s40 = scalar_select %p37, %s38, %s39
      %p43 = pneg %p37
      %p44 = scmp.eq.s32.totalorder %s28, 1
      %p45 = por %p43, %p44
      %p46 = scmp.ne.s32.totalorder %s38, %s41
      %p47 = scmp.eq.s32.totalorder %s28, 0
      %p48 = por %p46, %p47
      %p49 = scmp.ne.s32.totalorder %s38, %s41
      %p50 = scmp.eq.s32.totalorder %s33, 1
      %p51 = por %p49, %p50
      %p52 = scmp.ne.s32.totalorder %s41, %s42
      %p53 = scmp.eq.s32.totalorder %s33, 0
      %p54 = por %p52, %p53
      %p55 = scmp.ne.s32.totalorder %s41, %s42
      %p56 = scmp.eq.s32.totalorder %s34, 1
      %p57 = por %p55, %p56
      %p59 = scmp.ne.s32.totalorder %s42, %s58
      %p60 = scmp.eq.s32.totalorder %s34, 0
      %p61 = por %p59, %p60
      %s63 = sadd.s32 %s62, 1
      %p66 = scmp.eq.s32.totalorder %s28, 1
      %p67 = scmp.ne.s32.totalorder %s62, %s64
      %p68 = scmp.eq.s32.totalorder %s28, 0
      %p69 = por %p67, %p68
      %p70 = scmp.ne.s32.totalorder %s62, %s64
      %p71 = scmp.eq.s32.totalorder %s33, 1
      %p72 = por %p70, %p71
      %p73 = scmp.ne.s32.totalorder %s64, %s65
      %p74 = scmp.eq.s32.totalorder %s33, 0
      %p75 = por %p73, %p74
      %p76 = scmp.ne.s32.totalorder %s64, %s65
      %p77 = scmp.eq.s32.totalorder %s34, 1
      %p78 = por %p76, %p77
      %p80 = scmp.ne.s32.totalorder %s65, %s79
      %p81 = scmp.eq.s32.totalorder %s34, 0
      %p82 = por %p80, %p81
      %s84 = sadd.s32 %s83, 1
      %p87 = scmp.eq.s32.totalorder %s28, 1
      %p88 = scmp.ne.s32.totalorder %s83, %s85
      %p89 = scmp.eq.s32.totalorder %s28, 0
      %p90 = por %p88, %p89
      %p91 = scmp.ne.s32.totalorder %s83, %s85
      %p92 = scmp.eq.s32.totalorder %s33, 1
      %p93 = por %p91, %p92
      %p94 = scmp.ne.s32.totalorder %s85, %s86
      %p95 = scmp.eq.s32.totalorder %s33, 0
      %p96 = por %p94, %p95
      %p97 = scmp.ne.s32.totalorder %s85, %s86
      %p98 = scmp.eq.s32.totalorder %s34, 1
      %p99 = por %p97, %p98
      %p101 = scmp.ne.s32.totalorder %s86, %s100
      %p102 = scmp.eq.s32.totalorder %s34, 0
      %p103 = por %p101, %p102
      %s105 = sadd.s32 %s104, 1
      %p108 = scmp.eq.s32.totalorder %s28, 1
      %p109 = scmp.ne.s32.totalorder %s104, %s106
      %p110 = scmp.eq.s32.totalorder %s28, 0
      %p111 = por %p109, %p110
      %p112 = scmp.ne.s32.totalorder %s104, %s106
      %p113 = scmp.eq.s32.totalorder %s33, 1
      %p114 = por %p112, %p113
      %p115 = scmp.ne.s32.totalorder %s106, %s107
      %p116 = scmp.eq.s32.totalorder %s33, 0
      %p117 = por %p115, %p116
      %p118 = scmp.ne.s32.totalorder %s106, %s107
      %p119 = scmp.eq.s32.totalorder %s34, 1
      %p120 = por %p118, %p119
      %p122 = scmp.ne.s32.totalorder %s107, %s121
      %p123 = scmp.eq.s32.totalorder %s34, 0
      %p124 = por %p122, %p123
      %s126 = sadd.s32 %s125, 1
      %p129 = scmp.eq.s32.totalorder %s28, 1
      %p130 = scmp.ne.s32.totalorder %s125, %s127
      %p131 = scmp.eq.s32.totalorder %s28, 0
      %p132 = por %p130, %p131
      %p133 = scmp.ne.s32.totalorder %s125, %s127
      %p134 = scmp.eq.s32.totalorder %s33, 1
      %p135 = por %p133, %p134
      %p136 = scmp.ne.s32.totalorder %s127, %s128
      %p137 = scmp.eq.s32.totalorder %s33, 0
      %p138 = por %p136, %p137
      %p139 = scmp.ne.s32.totalorder %s127, %s128
      %p140 = scmp.eq.s32.totalorder %s34, 1
      %p141 = por %p139, %p140
      %p143 = scmp.ne.s32.totalorder %s128, %s142
      %p144 = scmp.eq.s32.totalorder %s34, 0
      %p145 = por %p143, %p144
      %s147 = sadd.s32 %s146, 1
      %p150 = scmp.eq.s32.totalorder %s28, 1
      %p151 = scmp.ne.s32.totalorder %s146, %s148
      %p152 = scmp.eq.s32.totalorder %s28, 0
      %p153 = por %p151, %p152
      %p154 = scmp.ne.s32.totalorder %s146, %s148
      %p155 = scmp.eq.s32.totalorder %s33, 1
      %p156 = por %p154, %p155
      %p157 = scmp.ne.s32.totalorder %s148, %s149
      %p158 = scmp.eq.s32.totalorder %s33, 0
      %p159 = por %p157, %p158
      %p160 = scmp.ne.s32.totalorder %s148, %s149
      %p161 = scmp.eq.s32.totalorder %s34, 1
      %p162 = por %p160, %p161
      %p164 = scmp.ne.s32.totalorder %s149, %s163
      %p165 = scmp.eq.s32.totalorder %s34, 0
      %p166 = por %p164, %p165
      %s168 = sadd.s32 %s167, 1
      %p171 = scmp.eq.s32.totalorder %s28, 1
      %p172 = scmp.ne.s32.totalorder %s167, %s169
      %p173 = scmp.eq.s32.totalorder %s28, 0
      %p174 = por %p172, %p173
      %p175 = scmp.ne.s32.totalorder %s167, %s169
      %p176 = scmp.eq.s32.totalorder %s33, 1
      %p177 = por %p175, %p176
      %p178 = scmp.ne.s32.totalorder %s169, %s170
      %p179 = scmp.eq.s32.totalorder %s33, 0
      %p180 = por %p178, %p179
      %p181 = scmp.ne.s32.totalorder %s169, %s170
      %p182 = scmp.eq.s32.totalorder %s34, 1
      %p183 = por %p181, %p182
      %p185 = scmp.ne.s32.totalorder %s170, %s184
      %p186 = scmp.eq.s32.totalorder %s34, 0
      %p187 = por %p185, %p186
      %s189 = sadd.s32 %s188, 1
      %p192 = scmp.eq.s32.totalorder %s28, 1
      %p193 = scmp.ne.s32.totalorder %s188, %s190
      %p194 = scmp.eq.s32.totalorder %s28, 0
      %p195 = por %p193, %p194
      %p196 = scmp.ne.s32.totalorder %s188, %s190
      %p197 = scmp.eq.s32.totalorder %s33, 1
      %p198 = por %p196, %p197
      %p199 = scmp.ne.s32.totalorder %s190, %s191
      %p200 = scmp.eq.s32.totalorder %s33, 0
      %p201 = por %p199, %p200
      %p202 = scmp.ne.s32.totalorder %s190, %s191
      %p203 = scmp.eq.s32.totalorder %s34, 1
      %p204 = por %p202, %p203
      %p206 = scmp.ne.s32.totalorder %s191, %s205
      %p207 = scmp.eq.s32.totalorder %s34, 0
      %p208 = por %p206, %p207
      %s210 = sadd.s32 %s209, 1
      %p213 = scmp.eq.s32.totalorder %s28, 1
      %p214 = scmp.ne.s32.totalorder %s209, %s211
      %p215 = scmp.eq.s32.totalorder %s28, 0
      %p216 = por %p214, %p215
      %p217 = scmp.ne.s32.totalorder %s209, %s211
      %p218 = scmp.eq.s32.totalorder %s33, 1
      %p219 = por %p217, %p218
      %p220 = scmp.ne.s32.totalorder %s211, %s212
      %p221 = scmp.eq.s32.totalorder %s33, 0
      %p222 = por %p220, %p221
      %p223 = scmp.ne.s32.totalorder %s211, %s212
      %p224 = scmp.eq.s32.totalorder %s34, 1
      %p225 = por %p223, %p224
      %p227 = scmp.ne.s32.totalorder %s212, %s226
      %p228 = scmp.eq.s32.totalorder %s34, 0
      %p229 = por %p227, %p228
      %s230 = ssub.s32 %s28, %s35
      %p231 = scmp.eq.s32.totalorder %s230, 0
      %s233 = sadd.s32 %s232, 1
      %s234 = scalar_select %p231, %s232, %s233
      %p237 = pneg %p231
      %p238 = scmp.eq.s32.totalorder %s28, 1
      %p239 = por %p237, %p238
      %p240 = scmp.ne.s32.totalorder %s232, %s235
      %p241 = scmp.eq.s32.totalorder %s28, 0
      %p242 = por %p240, %p241
      %p243 = scmp.ne.s32.totalorder %s232, %s235
      %p244 = scmp.eq.s32.totalorder %s33, 1
      %p245 = por %p243, %p244
      %p246 = scmp.ne.s32.totalorder %s235, %s236
      %p247 = scmp.eq.s32.totalorder %s33, 0
      %p248 = por %p246, %p247
      %p249 = scmp.ne.s32.totalorder %s235, %s236
      %p250 = scmp.eq.s32.totalorder %s34, 1
      %p251 = por %p249, %p250
      %p253 = scmp.ne.s32.totalorder %s236, %s252
      %p254 = scmp.eq.s32.totalorder %s34, 0
      %p255 = por %p253, %p254
      %s256 = ssub.s32 %s28, %s35
      %p257 = scmp.eq.s32.totalorder %s256, 0
      %s259 = sadd.s32 %s258, 1
      %s260 = scalar_select %p257, %s258, %s259
      %p263 = pneg %p257
      %p264 = scmp.eq.s32.totalorder %s28, 1
      %p265 = por %p263, %p264
      %p266 = scmp.ne.s32.totalorder %s258, %s261
      %p267 = scmp.eq.s32.totalorder %s28, 0
      %p268 = por %p266, %p267
      %p269 = scmp.ne.s32.totalorder %s258, %s261
      %p270 = scmp.eq.s32.totalorder %s33, 1
      %p271 = por %p269, %p270
      %p272 = scmp.ne.s32.totalorder %s261, %s262
      %p273 = scmp.eq.s32.totalorder %s33, 0
      %p274 = por %p272, %p273
      %p275 = scmp.ne.s32.totalorder %s261, %s262
      %p276 = scmp.eq.s32.totalorder %s34, 1
      %p277 = por %p275, %p276
      %p279 = scmp.ne.s32.totalorder %s262, %s278
      %p280 = scmp.eq.s32.totalorder %s34, 0
      %p281 = por %p279, %p280
      %p282 = scmp.le.s32.totalorder 1, %s28
      %p283 = scmp.lt.s32.totalorder %s28, 3
      %p284 = pnand %p282, %p283
      %p285 = pneg %p284
      // Predicated region
      $region9: #{tpu_custom_call.1} parent=5 // pred_check
        _
      $region10: #{tpu_custom_call.1} parent=5 // pred_check_branch
        %287 = sbr.rel (%p284) target = $region12
      $region11: #{tpu_custom_call.1} parent=5 // pred_region
        %s288 = ssub.s32 %s28, 1
        // Predicated region
        $region13: #{tpu_custom_call.1} parent=11 // pred_check
          %p289 = pneg %p75
        $region14: #{tpu_custom_call.1} parent=11 // pred_check_branch
          %291 = sbr.rel (%p289) target = $region16
        $region15: #{tpu_custom_call.1} parent=11 // pred_region
          %293 = vsyncadd [#allocation6], 0
          %s294 = sshll.u32 %s1, 4
          %s295 = int_to_ptr.hbm [resolvable:$true] %s294
          %s296 = sshll.u32 [#allocation5], 4
          %s297 = int_to_ptr.vmem [resolvable:$true] %s296
          %302 = dma.hbm_to_vmem [thread:$0]  %s295, 2048, %s297, [#allocation6], 128, 128, 8
        $region16: #{tpu_custom_call.1} parent=11 // pred_fallthru
          _
        // Predicated region
        $region17: #{tpu_custom_call.1} parent=11 // pred_check
          %p303 = pneg %p96
        $region18: #{tpu_custom_call.1} parent=11 // pred_check_branch
          %305 = sbr.rel (%p303) target = $region20
        $region19: #{tpu_custom_call.1} parent=11 // pred_region
          _
        $region20: #{tpu_custom_call.1} parent=11 // pred_fallthru
          _
        // Predicated region
        $region21: #{tpu_custom_call.1} parent=11 // pred_check
          %p306 = pneg %p117
        $region22: #{tpu_custom_call.1} parent=11 // pred_check_branch
          %308 = sbr.rel (%p306) target = $region24
        $region23: #{tpu_custom_call.1} parent=11 // pred_region
          %310 = vsyncadd [#allocation6], 0
          %s311 = sshll.u32 %s3, 4
          %s312 = int_to_ptr.hbm [resolvable:$true] %s311
          %s313 = sshll.u32 [#allocation7], 4
          %s314 = int_to_ptr.vmem [resolvable:$true] %s313
          %319 = dma.hbm_to_vmem [thread:$0]  %s312, 2048, %s314, [#allocation6], 128, 128, 8
        $region24: #{tpu_custom_call.1} parent=11 // pred_fallthru
          _
        // Predicated region
        $region25: #{tpu_custom_call.1} parent=11 // pred_check
          %p320 = pneg %p138
        $region26: #{tpu_custom_call.1} parent=11 // pred_check_branch
          %322 = sbr.rel (%p320) target = $region28
        $region27: #{tpu_custom_call.1} parent=11 // pred_region
          _
        $region28: #{tpu_custom_call.1} parent=11 // pred_fallthru
          _
        // Predicated region
        $region29: #{tpu_custom_call.1} parent=11 // pred_check
          %p323 = pneg %p159
        $region30: #{tpu_custom_call.1} parent=11 // pred_check_branch
          %325 = sbr.rel (%p323) target = $region32
        $region31: #{tpu_custom_call.1} parent=11 // pred_region
          %327 = vsyncadd [#allocation9], 0
          %s328 = sshll.u32 %s5, 4
          %s329 = int_to_ptr.hbm [resolvable:$true] %s328
          %s330 = sshll.u32 [#allocation8], 4
          %s331 = int_to_ptr.vmem [resolvable:$true] %s330
          %336 = dma.hbm_to_vmem [thread:$0]  %s329, 2048, %s331, [#allocation9], 128, 128, 8
        $region32: #{tpu_custom_call.1} parent=11 // pred_fallthru
          _
        // Predicated region
        $region33: #{tpu_custom_call.1} parent=11 // pred_check
          %p337 = pneg %p180
        $region34: #{tpu_custom_call.1} parent=11 // pred_check_branch
          %339 = sbr.rel (%p337) target = $region36
        $region35: #{tpu_custom_call.1} parent=11 // pred_region
          _
        $region36: #{tpu_custom_call.1} parent=11 // pred_fallthru
          _
        // Predicated region
        $region37: #{tpu_custom_call.1} parent=11 // pred_check
          %p340 = pneg %p201
        $region38: #{tpu_custom_call.1} parent=11 // pred_check_branch
          %342 = sbr.rel (%p340) target = $region40
        $region39: #{tpu_custom_call.1} parent=11 // pred_region
          %344 = vsyncadd [#allocation9], 0
          %s345 = sshll.u32 %s7, 4
          %s346 = int_to_ptr.hbm [resolvable:$true] %s345
          %s347 = sshll.u32 [#allocation10], 4
          %s348 = int_to_ptr.vmem [resolvable:$true] %s347
          %353 = dma.hbm_to_vmem [thread:$0]  %s346, 2048, %s348, [#allocation9], 128, 128, 8
        $region40: #{tpu_custom_call.1} parent=11 // pred_fallthru
          _
        // Predicated region
        $region41: #{tpu_custom_call.1} parent=11 // pred_check
          %p354 = pneg %p222
        $region42: #{tpu_custom_call.1} parent=11 // pred_check_branch
          %356 = sbr.rel (%p354) target = $region44
        $region43: #{tpu_custom_call.1} parent=11 // pred_region
          _
        $region44: #{tpu_custom_call.1} parent=11 // pred_fallthru
          _
      $region12: #{tpu_custom_call.1} parent=5 // pred_fallthru
        _
      %p357 = scmp.lt.s32.totalorder %s28, 2
      // Predicated region
      $region45: #{tpu_custom_call.1} parent=5 // pred_check
        %p358 = pneg %p357
      $region46: #{tpu_custom_call.1} parent=5 // pred_check_branch
        %360 = sbr.rel (%p358) target = $region48
      $region47: #{tpu_custom_call.1} parent=5 // pred_region
        // Predicated region
        $region49: #{tpu_custom_call.1} parent=47 // pred_check
          %p361 = pneg %p48
        $region50: #{tpu_custom_call.1} parent=47 // pred_check_branch
          %363 = sbr.rel (%p361) target = $region52
        $region51: #{tpu_custom_call.1} parent=47 // pred_region
          %s364 = sand.u32 %s38, 1
          %s365 = scalar_lea.sflag [#allocation3], %s364
          %s366 = sand.u32 %s38, 1
          %s367 = smul.addr %s366, 128
          %s368 = scalar_lea.vmem [#allocation2], %s367
          %370 = vsyncadd %s365, 0
          %s371 = smul.addr %s28, 16
          %s372 = smul.addr %s371, 8
          %s373 = scalar_lea.hbm %s0, %s372
          %s374 = sshll.u32 %s373, 4
          %s375 = int_to_ptr.hbm [resolvable:$true] %s374
          %s376 = sshll.u32 %s368, 4
          %s377 = int_to_ptr.vmem [resolvable:$true] %s376
          %382 = dma.hbm_to_vmem [thread:$0]  %s375, 2048, %s377, %s365, 128, 128, 8
        $region52: #{tpu_custom_call.1} parent=47 // pred_fallthru
          _
      $region48: #{tpu_custom_call.1} parent=5 // pred_fallthru
        _
      %p383 = scmp.le.s32.totalorder 1, %s28
      %p384 = scmp.lt.s32.totalorder %s28, 3
      %p385 = pnand %p383, %p384
      %p386 = pneg %p385
      // Predicated region
      $region53: #{tpu_custom_call.1} parent=5 // pred_check
        _
      $region54: #{tpu_custom_call.1} parent=5 // pred_check_branch
        %388 = sbr.rel (%p385) target = $region56
      $region55: #{tpu_custom_call.1} parent=5 // pred_region
        %s389 = ssub.s32 %s28, 1
        %s390 = sand.u32 %s41, 1
        %s391 = scalar_lea.sflag [#allocation3], %s390
        %s392 = sand.u32 %s41, 1
        %s393 = smul.addr %s392, 128
        %s394 = scalar_lea.vmem [#allocation2], %s393
        // Predicated region
        $region57: #{tpu_custom_call.1} parent=55 // pred_check
          %p395 = pneg %p54
        $region58: #{tpu_custom_call.1} parent=55 // pred_check_branch
          %397 = sbr.rel (%p395) target = $region60
        $region59: #{tpu_custom_call.1} parent=55 // pred_region
          %399 = dma.done %s391, 2048
        $region60: #{tpu_custom_call.1} parent=55 // pred_fallthru
          _
        // Predicated region
        $region61: #{tpu_custom_call.1} parent=55 // pred_check
          %p400 = pneg %p75
        $region62: #{tpu_custom_call.1} parent=55 // pred_check_branch
          %402 = sbr.rel (%p400) target = $region64
        $region63: #{tpu_custom_call.1} parent=55 // pred_region
          %404 = dma.done [#allocation6], 2048
        $region64: #{tpu_custom_call.1} parent=55 // pred_fallthru
          _
        // Predicated region
        $region65: #{tpu_custom_call.1} parent=55 // pred_check
          %p405 = pneg %p117
        $region66: #{tpu_custom_call.1} parent=55 // pred_check_branch
          %407 = sbr.rel (%p405) target = $region68
        $region67: #{tpu_custom_call.1} parent=55 // pred_region
          %409 = dma.done [#allocation6], 2048
        $region68: #{tpu_custom_call.1} parent=55 // pred_fallthru
          _
        // Predicated region
        $region69: #{tpu_custom_call.1} parent=55 // pred_check
          %p410 = pneg %p159
        $region70: #{tpu_custom_call.1} parent=55 // pred_check_branch
          %412 = sbr.rel (%p410) target = $region72
        $region71: #{tpu_custom_call.1} parent=55 // pred_region
          %414 = dma.done [#allocation9], 2048
        $region72: #{tpu_custom_call.1} parent=55 // pred_fallthru
          _
        // Predicated region
        $region73: #{tpu_custom_call.1} parent=55 // pred_check
          %p415 = pneg %p201
        $region74: #{tpu_custom_call.1} parent=55 // pred_check_branch
          %417 = sbr.rel (%p415) target = $region76
        $region75: #{tpu_custom_call.1} parent=55 // pred_region
          %419 = dma.done [#allocation9], 2048
        $region76: #{tpu_custom_call.1} parent=55 // pred_fallthru
          _
        %s420 = sand.u32 %s41, 1
        %s421 = scalar_lea.sflag [#allocation3], %s420
        %s422 = sand.u32 %s41, 1
        %s423 = smul.addr %s422, 128
        %s424 = scalar_lea.vmem [#allocation2], %s423
        %p425 = pneg %p54
        %p426 = pneg %p51
        %p427 = pneg %p75
        %p428 = pneg %p72
        %p429 = pneg %p96
        %p430 = pneg %p93
        %p431 = pneg %p117
        %p432 = pneg %p114
        %p433 = pneg %p138
        %p434 = pneg %p135
        %p435 = pneg %p159
        %p436 = pneg %p156
        %p437 = pneg %p180
        %p438 = pneg %p177
        %p439 = pneg %p201
        %p440 = pneg %p198
        %p441 = pneg %p222
        %p442 = pneg %p219
        %p443 = pneg %p248
        %p444 = pneg %p245
        %s445 = sand.u32 %s235, 1
        %s446 = scalar_lea.sflag [#allocation4], %s445
        %s447 = sand.u32 %s235, 1
        %s448 = smul.addr %s447, 128
        %s449 = scalar_lea.vmem [#allocation11], %s448
        %p450 = pneg %p274
        %p451 = pneg %p271
        %s452 = sand.u32 %s261, 1
        %s453 = scalar_lea.sflag [#allocation13], %s452
        %s454 = sand.u32 %s261, 1
        %s455 = smul.addr %s454, 256
        %s456 = scalar_lea.vmem [#allocation12], %s455
        %v457 = vld [vmem:[%s394] sm:$0xff]
        %v458 = vld [vmem:[%s394 + $0x8] sm:$0xff]
        %v459 = vld [vmem:[%s394 + $0x10] sm:$0xff]
        %v460 = vld [vmem:[%s394 + $0x18] sm:$0xff]
        %v461 = vld [vmem:[%s394 + $0x20] sm:$0xff]
        %v462 = vld [vmem:[%s394 + $0x28] sm:$0xff]
        %v463 = vld [vmem:[%s394 + $0x30] sm:$0xff]
        %v464 = vld [vmem:[%s394 + $0x38] sm:$0xff]
        %v465 = vld [vmem:[%s394 + $0x40] sm:$0xff]
        %v466 = vld [vmem:[%s394 + $0x48] sm:$0xff]
        %v467 = vld [vmem:[%s394 + $0x50] sm:$0xff]
        %v468 = vld [vmem:[%s394 + $0x58] sm:$0xff]
        %v469 = vld [vmem:[%s394 + $0x60] sm:$0xff]
        %v470 = vld [vmem:[%s394 + $0x68] sm:$0xff]
        %v471 = vld [vmem:[%s394 + $0x70] sm:$0xff]
        %v472 = vld [vmem:[%s394 + $0x78] sm:$0xff]
        %v473 = vld [vmem:[#allocation5] sm:$0xff]
        %v474 = vld [vmem:[#allocation5 + $0x8] sm:$0xff]
        %v475 = vld [vmem:[#allocation5 + $0x10] sm:$0xff]
        %v476 = vld [vmem:[#allocation5 + $0x18] sm:$0xff]
        %v477 = vld [vmem:[#allocation5 + $0x20] sm:$0xff]
        %v478 = vld [vmem:[#allocation5 + $0x28] sm:$0xff]
        %v479 = vld [vmem:[#allocation5 + $0x30] sm:$0xff]
        %v480 = vld [vmem:[#allocation5 + $0x38] sm:$0xff]
        %v481 = vld [vmem:[#allocation5 + $0x40] sm:$0xff]
        %v482 = vld [vmem:[#allocation5 + $0x48] sm:$0xff]
        %v483 = vld [vmem:[#allocation5 + $0x50] sm:$0xff]
        %v484 = vld [vmem:[#allocation5 + $0x58] sm:$0xff]
        %v485 = vld [vmem:[#allocation5 + $0x60] sm:$0xff]
        %v486 = vld [vmem:[#allocation5 + $0x68] sm:$0xff]
        %v487 = vld [vmem:[#allocation5 + $0x70] sm:$0xff]
        %v488 = vld [vmem:[#allocation5 + $0x78] sm:$0xff]
        %v489 = vld [vmem:[%s2] sm:$0x1]
        %v491 = vperm.slane %v489, 0
        %493 = vmatpush.msra.mxu0 %v488
        %494 = vmatpush.msra.mxu0 %v487
        %495 = vmatpush.msra.mxu0 %v486
        %496 = vmatpush.msra.mxu0 %v485
        %497 = vmatpush.msra.mxu0 %v484
        %498 = vmatpush.msra.mxu0 %v483
        %499 = vmatpush.msra.mxu0 %v482
        %500 = vmatpush.msra.mxu0 %v481
        %501 = vmatpush.msra.mxu0 %v480
        %502 = vmatpush.msra.mxu0 %v479
        %503 = vmatpush.msra.mxu0 %v478
        %504 = vmatpush.msra.mxu0 %v477
        %505 = vmatpush.msra.mxu0 %v476
        %506 = vmatpush.msra.mxu0 %v475
        %507 = vmatpush.msra.mxu0 %v474
        %508 = vmatpush.msra.mxu0 %v473
        %509 = vmatmul.f32.gmra.mxu0 %v457
        %v510 = vpop.f32.mrf.mxu0
        %v511 = vadd.f32 %v491, %v510
        %512 = vmatmul.f32.gmra.mxu0 %v458
        %v513 = vpop.f32.mrf.mxu0
        %v514 = vadd.f32 %v491, %v513
        %515 = vmatmul.f32.gmra.mxu0 %v459
        %v516 = vpop.f32.mrf.mxu0
        %v517 = vadd.f32 %v491, %v516
        %518 = vmatmul.f32.gmra.mxu0 %v460
        %v519 = vpop.f32.mrf.mxu0
        %v520 = vadd.f32 %v491, %v519
        %521 = vmatmul.f32.gmra.mxu0 %v461
        %v522 = vpop.f32.mrf.mxu0
        %v523 = vadd.f32 %v491, %v522
        %524 = vmatmul.f32.gmra.mxu0 %v462
        %v525 = vpop.f32.mrf.mxu0
        %v526 = vadd.f32 %v491, %v525
        %527 = vmatmul.f32.gmra.mxu0 %v463
        %v528 = vpop.f32.mrf.mxu0
        %v529 = vadd.f32 %v491, %v528
        %530 = vmatmul.f32.gmra.mxu0 %v464
        %v531 = vpop.f32.mrf.mxu0
        %v532 = vadd.f32 %v491, %v531
        %533 = vmatmul.f32.gmra.mxu0 %v465
        %v534 = vpop.f32.mrf.mxu0
        %v535 = vadd.f32 %v491, %v534
        %536 = vmatmul.f32.gmra.mxu0 %v466
        %v537 = vpop.f32.mrf.mxu0
        %v538 = vadd.f32 %v491, %v537
        %539 = vmatmul.f32.gmra.mxu0 %v467
        %v540 = vpop.f32.mrf.mxu0
        %v541 = vadd.f32 %v491, %v540
        %542 = vmatmul.f32.gmra.mxu0 %v468
        %v543 = vpop.f32.mrf.mxu0
        %v544 = vadd.f32 %v491, %v543
        %545 = vmatmul.f32.gmra.mxu0 %v469
        %v546 = vpop.f32.mrf.mxu0
        %v547 = vadd.f32 %v491, %v546
        %548 = vmatmul.f32.gmra.mxu0 %v470
        %v549 = vpop.f32.mrf.mxu0
        %v550 = vadd.f32 %v491, %v549
        %551 = vmatmul.f32.gmra.mxu0 %v471
        %v552 = vpop.f32.mrf.mxu0
        %v553 = vadd.f32 %v491, %v552
        %554 = vmatmul.f32.gmra.mxu0 %v472
        %v555 = vpop.f32.mrf.mxu0
        %v556 = vadd.f32 %v491, %v555
        %557 = vdwg.mxu0
        %v558 = vld [vmem:[#allocation7] sm:$0xff]
        %v559 = vld [vmem:[#allocation7 + $0x8] sm:$0xff]
        %v560 = vld [vmem:[#allocation7 + $0x10] sm:$0xff]
        %v561 = vld [vmem:[#allocation7 + $0x18] sm:$0xff]
        %v562 = vld [vmem:[#allocation7 + $0x20] sm:$0xff]
        %v563 = vld [vmem:[#allocation7 + $0x28] sm:$0xff]
        %v564 = vld [vmem:[#allocation7 + $0x30] sm:$0xff]
        %v565 = vld [vmem:[#allocation7 + $0x38] sm:$0xff]
        %v566 = vld [vmem:[#allocation7 + $0x40] sm:$0xff]
        %v567 = vld [vmem:[#allocation7 + $0x48] sm:$0xff]
        %v568 = vld [vmem:[#allocation7 + $0x50] sm:$0xff]
        %v569 = vld [vmem:[#allocation7 + $0x58] sm:$0xff]
        %v570 = vld [vmem:[#allocation7 + $0x60] sm:$0xff]
        %v571 = vld [vmem:[#allocation7 + $0x68] sm:$0xff]
        %v572 = vld [vmem:[#allocation7 + $0x70] sm:$0xff]
        %v573 = vld [vmem:[#allocation7 + $0x78] sm:$0xff]
        %v574 = vld [vmem:[%s4] sm:$0x1]
        %v576 = vperm.slane %v574, 0
        %578 = vmatpush.msra.mxu0 %v573
        %579 = vmatpush.msra.mxu0 %v572
        %580 = vmatpush.msra.mxu0 %v571
        %581 = vmatpush.msra.mxu0 %v570
        %582 = vmatpush.msra.mxu0 %v569
        %583 = vmatpush.msra.mxu0 %v568
        %584 = vmatpush.msra.mxu0 %v567
        %585 = vmatpush.msra.mxu0 %v566
        %586 = vmatpush.msra.mxu0 %v565
        %587 = vmatpush.msra.mxu0 %v564
        %588 = vmatpush.msra.mxu0 %v563
        %589 = vmatpush.msra.mxu0 %v562
        %590 = vmatpush.msra.mxu0 %v561
        %591 = vmatpush.msra.mxu0 %v560
        %592 = vmatpush.msra.mxu0 %v559
        %593 = vmatpush.msra.mxu0 %v558
        %594 = vmatmul.f32.gmra.mxu0 %v457
        %v595 = vpop.f32.mrf.mxu0
        %v596 = vadd.f32 %v576, %v595
        %597 = vmatmul.f32.gmra.mxu0 %v458
        %v598 = vpop.f32.mrf.mxu0
        %v599 = vadd.f32 %v576, %v598
        %600 = vmatmul.f32.gmra.mxu0 %v459
        %v601 = vpop.f32.mrf.mxu0
        %v602 = vadd.f32 %v576, %v601
        %603 = vmatmul.f32.gmra.mxu0 %v460
        %v604 = vpop.f32.mrf.mxu0
        %v605 = vadd.f32 %v576, %v604
        %606 = vmatmul.f32.gmra.mxu0 %v461
        %v607 = vpop.f32.mrf.mxu0
        %v608 = vadd.f32 %v576, %v607
        %609 = vmatmul.f32.gmra.mxu0 %v462
        %v610 = vpop.f32.mrf.mxu0
        %v611 = vadd.f32 %v576, %v610
        %612 = vmatmul.f32.gmra.mxu0 %v463
        %v613 = vpop.f32.mrf.mxu0
        %v614 = vadd.f32 %v576, %v613
        %615 = vmatmul.f32.gmra.mxu0 %v464
        %v616 = vpop.f32.mrf.mxu0
        %v617 = vadd.f32 %v576, %v616
        %618 = vmatmul.f32.gmra.mxu0 %v465
        %v619 = vpop.f32.mrf.mxu0
        %v620 = vadd.f32 %v576, %v619
        %621 = vmatmul.f32.gmra.mxu0 %v466
        %v622 = vpop.f32.mrf.mxu0
        %v623 = vadd.f32 %v576, %v622
        %624 = vmatmul.f32.gmra.mxu0 %v467
        %v625 = vpop.f32.mrf.mxu0
        %v626 = vadd.f32 %v576, %v625
        %627 = vmatmul.f32.gmra.mxu0 %v468
        %v628 = vpop.f32.mrf.mxu0
        %v629 = vadd.f32 %v576, %v628
        %630 = vmatmul.f32.gmra.mxu0 %v469
        %v631 = vpop.f32.mrf.mxu0
        %v632 = vadd.f32 %v576, %v631
        %633 = vmatmul.f32.gmra.mxu0 %v470
        %v634 = vpop.f32.mrf.mxu0
        %v635 = vadd.f32 %v576, %v634
        %636 = vmatmul.f32.gmra.mxu0 %v471
        %v637 = vpop.f32.mrf.mxu0
        %v638 = vadd.f32 %v576, %v637
        %639 = vmatmul.f32.gmra.mxu0 %v472
        %v640 = vpop.f32.mrf.mxu0
        %v641 = vadd.f32 %v576, %v640
        %642 = vdwg.mxu0
        %v643 = vld [vmem:[#allocation8] sm:$0xff]
        %v644 = vld [vmem:[#allocation8 + $0x8] sm:$0xff]
        %v645 = vld [vmem:[#allocation8 + $0x10] sm:$0xff]
        %v646 = vld [vmem:[#allocation8 + $0x18] sm:$0xff]
        %v647 = vld [vmem:[#allocation8 + $0x20] sm:$0xff]
        %v648 = vld [vmem:[#allocation8 + $0x28] sm:$0xff]
        %v649 = vld [vmem:[#allocation8 + $0x30] sm:$0xff]
        %v650 = vld [vmem:[#allocation8 + $0x38] sm:$0xff]
        %v651 = vld [vmem:[#allocation8 + $0x40] sm:$0xff]
        %v652 = vld [vmem:[#allocation8 + $0x48] sm:$0xff]
        %v653 = vld [vmem:[#allocation8 + $0x50] sm:$0xff]
        %v654 = vld [vmem:[#allocation8 + $0x58] sm:$0xff]
        %v655 = vld [vmem:[#allocation8 + $0x60] sm:$0xff]
        %v656 = vld [vmem:[#allocation8 + $0x68] sm:$0xff]
        %v657 = vld [vmem:[#allocation8 + $0x70] sm:$0xff]
        %v658 = vld [vmem:[#allocation8 + $0x78] sm:$0xff]
        %v659 = vld [vmem:[%s6] sm:$0x1]
        %v661 = vperm.slane %v659, 0
        %663 = vmatpush.msra.mxu0 %v658
        %664 = vmatpush.msra.mxu0 %v657
        %665 = vmatpush.msra.mxu0 %v656
        %666 = vmatpush.msra.mxu0 %v655
        %667 = vmatpush.msra.mxu0 %v654
        %668 = vmatpush.msra.mxu0 %v653
        %669 = vmatpush.msra.mxu0 %v652
        %670 = vmatpush.msra.mxu0 %v651
        %671 = vmatpush.msra.mxu0 %v650
        %672 = vmatpush.msra.mxu0 %v649
        %673 = vmatpush.msra.mxu0 %v648
        %674 = vmatpush.msra.mxu0 %v647
        %675 = vmatpush.msra.mxu0 %v646
        %676 = vmatpush.msra.mxu0 %v645
        %677 = vmatpush.msra.mxu0 %v644
        %678 = vmatpush.msra.mxu0 %v643
        %679 = vmatmul.f32.gmra.mxu0 %v457
        %v680 = vpop.f32.mrf.mxu0
        %v681 = vadd.f32 %v661, %v680
        %682 = vmatmul.f32.gmra.mxu0 %v458
        %v683 = vpop.f32.mrf.mxu0
        %v684 = vadd.f32 %v661, %v683
        %685 = vmatmul.f32.gmra.mxu0 %v459
        %v686 = vpop.f32.mrf.mxu0
        %v687 = vadd.f32 %v661, %v686
        %688 = vmatmul.f32.gmra.mxu0 %v460
        %v689 = vpop.f32.mrf.mxu0
        %v690 = vadd.f32 %v661, %v689
        %691 = vmatmul.f32.gmra.mxu0 %v461
        %v692 = vpop.f32.mrf.mxu0
        %v693 = vadd.f32 %v661, %v692
        %694 = vmatmul.f32.gmra.mxu0 %v462
        %v695 = vpop.f32.mrf.mxu0
        %v696 = vadd.f32 %v661, %v695
        %697 = vmatmul.f32.gmra.mxu0 %v463
        %v698 = vpop.f32.mrf.mxu0
        %v699 = vadd.f32 %v661, %v698
        %700 = vmatmul.f32.gmra.mxu0 %v464
        %v701 = vpop.f32.mrf.mxu0
        %v702 = vadd.f32 %v661, %v701
        %703 = vmatmul.f32.gmra.mxu0 %v465
        %v704 = vpop.f32.mrf.mxu0
        %v705 = vadd.f32 %v661, %v704
        %706 = vmatmul.f32.gmra.mxu0 %v466
        %v707 = vpop.f32.mrf.mxu0
        %v708 = vadd.f32 %v661, %v707
        %709 = vmatmul.f32.gmra.mxu0 %v467
        %v710 = vpop.f32.mrf.mxu0
        %v711 = vadd.f32 %v661, %v710
        %712 = vmatmul.f32.gmra.mxu0 %v468
        %v713 = vpop.f32.mrf.mxu0
        %v714 = vadd.f32 %v661, %v713
        %715 = vmatmul.f32.gmra.mxu0 %v469
        %v716 = vpop.f32.mrf.mxu0
        %v717 = vadd.f32 %v661, %v716
        %718 = vmatmul.f32.gmra.mxu0 %v470
        %v719 = vpop.f32.mrf.mxu0
        %v720 = vadd.f32 %v661, %v719
        %721 = vmatmul.f32.gmra.mxu0 %v471
        %v722 = vpop.f32.mrf.mxu0
        %v723 = vadd.f32 %v661, %v722
        %724 = vmatmul.f32.gmra.mxu0 %v472
        %v725 = vpop.f32.mrf.mxu0
        %v726 = vadd.f32 %v661, %v725
        %727 = vdwg.mxu0
        %vm728 = vcmask 523264
        %v730 = vsel %vm728, %v511, 0
        %v733 = vsel %vm728, %v514, 0
        %v736 = vsel %vm728, %v517, 0
        %v739 = vsel %vm728, %v520, 0
        %v742 = vsel %vm728, %v523, 0
        %v745 = vsel %vm728, %v526, 0
        %v748 = vsel %vm728, %v529, 0
        %v751 = vsel %vm728, %v532, 0
        %v754 = vsel %vm728, %v535, 0
        %v757 = vsel %vm728, %v538, 0
        %v760 = vsel %vm728, %v541, 0
        %v763 = vsel %vm728, %v544, 0
        %v766 = vsel %vm728, %v547, 0
        %v769 = vsel %vm728, %v550, 0
        %v772 = vsel %vm728, %v553, 0
        %v775 = vsel %vm728, %v556, 0
        %v778 = vsel %vm728, %v596, 0
        %v781 = vsel %vm728, %v599, 0
        %v784 = vsel %vm728, %v602, 0
        %v787 = vsel %vm728, %v605, 0
        %v790 = vsel %vm728, %v608, 0
        %v793 = vsel %vm728, %v611, 0
        %v796 = vsel %vm728, %v614, 0
        %v799 = vsel %vm728, %v617, 0
        %v802 = vsel %vm728, %v620, 0
        %v805 = vsel %vm728, %v623, 0
        %v808 = vsel %vm728, %v626, 0
        %v811 = vsel %vm728, %v629, 0
        %v814 = vsel %vm728, %v632, 0
        %v817 = vsel %vm728, %v635, 0
        %v820 = vsel %vm728, %v638, 0
        %v823 = vsel %vm728, %v641, 0
        %825 = vmatpush.xpose.msra.mxu0 %v823
        %826 = vmatpush.xpose.msra.mxu0 %v820
        %827 = vmatpush.xpose.msra.mxu0 %v817
        %828 = vmatpush.xpose.msra.mxu0 %v814
        %829 = vmatpush.xpose.msra.mxu0 %v811
        %830 = vmatpush.xpose.msra.mxu0 %v808
        %831 = vmatpush.xpose.msra.mxu0 %v805
        %832 = vmatpush.xpose.msra.mxu0 %v802
        %833 = vmatpush.xpose.msra.mxu0 %v799
        %834 = vmatpush.xpose.msra.mxu0 %v796
        %835 = vmatpush.xpose.msra.mxu0 %v793
        %836 = vmatpush.xpose.msra.mxu0 %v790
        %837 = vmatpush.xpose.msra.mxu0 %v787
        %838 = vmatpush.xpose.msra.mxu0 %v784
        %839 = vmatpush.xpose.msra.mxu0 %v781
        %840 = vmatpush.xpose.msra.mxu0 %v778
        %841 = vmatmul.f32.gmra.mxu0 %v730
        %v842 = vpop.f32.mrf.mxu0
        %v843 = vadd.f32 0.0, %v842
        %844 = vmatmul.f32.gmra.mxu0 %v733
        %v845 = vpop.f32.mrf.mxu0
        %v846 = vadd.f32 0.0, %v845
        %847 = vmatmul.f32.gmra.mxu0 %v736
        %v848 = vpop.f32.mrf.mxu0
        %v849 = vadd.f32 0.0, %v848
        %850 = vmatmul.f32.gmra.mxu0 %v739
        %v851 = vpop.f32.mrf.mxu0
        %v852 = vadd.f32 0.0, %v851
        %853 = vmatmul.f32.gmra.mxu0 %v742
        %v854 = vpop.f32.mrf.mxu0
        %v855 = vadd.f32 0.0, %v854
        %856 = vmatmul.f32.gmra.mxu0 %v745
        %v857 = vpop.f32.mrf.mxu0
        %v858 = vadd.f32 0.0, %v857
        %859 = vmatmul.f32.gmra.mxu0 %v748
        %v860 = vpop.f32.mrf.mxu0
        %v861 = vadd.f32 0.0, %v860
        %862 = vmatmul.f32.gmra.mxu0 %v751
        %v863 = vpop.f32.mrf.mxu0
        %v864 = vadd.f32 0.0, %v863
        %865 = vmatmul.f32.gmra.mxu0 %v754
        %v866 = vpop.f32.mrf.mxu0
        %v867 = vadd.f32 0.0, %v866
        %868 = vmatmul.f32.gmra.mxu0 %v757
        %v869 = vpop.f32.mrf.mxu0
        %v870 = vadd.f32 0.0, %v869
        %871 = vmatmul.f32.gmra.mxu0 %v760
        %v872 = vpop.f32.mrf.mxu0
        %v873 = vadd.f32 0.0, %v872
        %874 = vmatmul.f32.gmra.mxu0 %v763
        %v875 = vpop.f32.mrf.mxu0
        %v876 = vadd.f32 0.0, %v875
        %877 = vmatmul.f32.gmra.mxu0 %v766
        %v878 = vpop.f32.mrf.mxu0
        %v879 = vadd.f32 0.0, %v878
        %880 = vmatmul.f32.gmra.mxu0 %v769
        %v881 = vpop.f32.mrf.mxu0
        %v882 = vadd.f32 0.0, %v881
        %883 = vmatmul.f32.gmra.mxu0 %v772
        %v884 = vpop.f32.mrf.mxu0
        %v885 = vadd.f32 0.0, %v884
        %886 = vmatmul.f32.gmra.mxu0 %v775
        %v887 = vpop.f32.mrf.mxu0
        %v888 = vadd.f32 0.0, %v887
        %889 = vdwg.mxu0
        %v890 = vmul.f32 %v843, 0.125
        %v891 = vmul.f32 %v846, 0.125
        %v892 = vmul.f32 %v849, 0.125
        %v893 = vmul.f32 %v852, 0.125
        %v894 = vmul.f32 %v855, 0.125
        %v895 = vmul.f32 %v858, 0.125
        %v896 = vmul.f32 %v861, 0.125
        %v897 = vmul.f32 %v864, 0.125
        %v898 = vmul.f32 %v867, 0.125
        %v899 = vmul.f32 %v870, 0.125
        %v900 = vmul.f32 %v873, 0.125
        %v901 = vmul.f32 %v876, 0.125
        %v902 = vmul.f32 %v879, 0.125
        %v903 = vmul.f32 %v882, 0.125
        %v904 = vmul.f32 %v885, 0.125
        %v905 = vmul.f32 %v888, 0.125
        %906 = vmax.xlane.f32.xlu0 %v890
        %v907 = vpop.xlane.xlu0 %906
        %908 = vmax.xlane.f32.xlu0 %v891
        %v909 = vpop.xlane.xlu0 %908
        %910 = vmax.xlane.f32.xlu0 %v892
        %v911 = vpop.xlane.xlu0 %910
        %912 = vmax.xlane.f32.xlu0 %v893
        %v913 = vpop.xlane.xlu0 %912
        %914 = vmax.xlane.f32.xlu0 %v894
        %v915 = vpop.xlane.xlu0 %914
        %916 = vmax.xlane.f32.xlu0 %v895
        %v917 = vpop.xlane.xlu0 %916
        %918 = vmax.xlane.f32.xlu0 %v896
        %v919 = vpop.xlane.xlu0 %918
        %920 = vmax.xlane.f32.xlu0 %v897
        %v921 = vpop.xlane.xlu0 %920
        %922 = vmax.xlane.f32.xlu0 %v898
        %v923 = vpop.xlane.xlu0 %922
        %924 = vmax.xlane.f32.xlu0 %v899
        %v925 = vpop.xlane.xlu0 %924
        %926 = vmax.xlane.f32.xlu0 %v900
        %v927 = vpop.xlane.xlu0 %926
        %928 = vmax.xlane.f32.xlu0 %v901
        %v929 = vpop.xlane.xlu0 %928
        %930 = vmax.xlane.f32.xlu0 %v902
        %v931 = vpop.xlane.xlu0 %930
        %932 = vmax.xlane.f32.xlu0 %v903
        %v933 = vpop.xlane.xlu0 %932
        %934 = vmax.xlane.f32.xlu0 %v904
        %v935 = vpop.xlane.xlu0 %934
        %936 = vmax.xlane.f32.xlu0 %v905
        %v937 = vpop.xlane.xlu0 %936
        %v938 = vsub.f32 %v890, %v907
        %v939 = vsub.f32 %v891, %v909
        %v940 = vsub.f32 %v892, %v911
        %v941 = vsub.f32 %v893, %v913
        %v942 = vsub.f32 %v894, %v915
        %v943 = vsub.f32 %v895, %v917
        %v944 = vsub.f32 %v896, %v919
        %v945 = vsub.f32 %v897, %v921
        %v946 = vsub.f32 %v898, %v923
        %v947 = vsub.f32 %v899, %v925
        %v948 = vsub.f32 %v900, %v927
        %v949 = vsub.f32 %v901, %v929
        %v950 = vsub.f32 %v902, %v931
        %v951 = vsub.f32 %v903, %v933
        %v952 = vsub.f32 %v904, %v935
        %v953 = vsub.f32 %v905, %v937
        %v954 = vmul.f32 %v938, 1.442695
        %v955 = vpow.pop %v954
        %v956 = vmul.f32 %v939, 1.442695
        %v957 = vpow.pop %v956
        %v958 = vmul.f32 %v940, 1.442695
        %v959 = vpow.pop %v958
        %v960 = vmul.f32 %v941, 1.442695
        %v961 = vpow.pop %v960
        %v962 = vmul.f32 %v942, 1.442695
        %v963 = vpow.pop %v962
        %v964 = vmul.f32 %v943, 1.442695
        %v965 = vpow.pop %v964
        %v966 = vmul.f32 %v944, 1.442695
        %v967 = vpow.pop %v966
        %v968 = vmul.f32 %v945, 1.442695
        %v969 = vpow.pop %v968
        %v970 = vmul.f32 %v946, 1.442695
        %v971 = vpow.pop %v970
        %v972 = vmul.f32 %v947, 1.442695
        %v973 = vpow.pop %v972
        %v974 = vmul.f32 %v948, 1.442695
        %v975 = vpow.pop %v974
        %v976 = vmul.f32 %v949, 1.442695
        %v977 = vpow.pop %v976
        %v978 = vmul.f32 %v950, 1.442695
        %v979 = vpow.pop %v978
        %v980 = vmul.f32 %v951, 1.442695
        %v981 = vpow.pop %v980
        %v982 = vmul.f32 %v952, 1.442695
        %v983 = vpow.pop %v982
        %v984 = vmul.f32 %v953, 1.442695
        %v985 = vpow.pop %v984
        %986 = vadd.xlane.f32.xlu0 %v955
        %v987 = vpop.xlane.xlu0 %986
        %988 = vadd.xlane.f32.xlu0 %v957
        %v989 = vpop.xlane.xlu0 %988
        %990 = vadd.xlane.f32.xlu0 %v959
        %v991 = vpop.xlane.xlu0 %990
        %992 = vadd.xlane.f32.xlu0 %v961
        %v993 = vpop.xlane.xlu0 %992
        %994 = vadd.xlane.f32.xlu0 %v963
        %v995 = vpop.xlane.xlu0 %994
        %996 = vadd.xlane.f32.xlu0 %v965
        %v997 = vpop.xlane.xlu0 %996
        %998 = vadd.xlane.f32.xlu0 %v967
        %v999 = vpop.xlane.xlu0 %998
        %1000 = vadd.xlane.f32.xlu0 %v969
        %v1001 = vpop.xlane.xlu0 %1000
        %1002 = vadd.xlane.f32.xlu0 %v971
        %v1003 = vpop.xlane.xlu0 %1002
        %1004 = vadd.xlane.f32.xlu0 %v973
        %v1005 = vpop.xlane.xlu0 %1004
        %1006 = vadd.xlane.f32.xlu0 %v975
        %v1007 = vpop.xlane.xlu0 %1006
        %1008 = vadd.xlane.f32.xlu0 %v977
        %v1009 = vpop.xlane.xlu0 %1008
        %1010 = vadd.xlane.f32.xlu0 %v979
        %v1011 = vpop.xlane.xlu0 %1010
        %1012 = vadd.xlane.f32.xlu0 %v981
        %v1013 = vpop.xlane.xlu0 %1012
        %1014 = vadd.xlane.f32.xlu0 %v983
        %v1015 = vpop.xlane.xlu0 %1014
        %1016 = vadd.xlane.f32.xlu0 %v985
        %v1017 = vpop.xlane.xlu0 %1016
        %v1018 = vrcp.pop %v987
        %v1019 = vmul.f32 %v987, %v1018
        %v1020 = vsub.f32 1.0, %v1019
        %v1021 = vmul.f32 %v1018, %v1020
        %v1022 = vadd.f32 %v1018, %v1021
        %vm1023 = vweird.f32 %v987
        %vm1024 = vweird.f32 %v1018
        %vm1025 = vmor %vm1023, %vm1024
        %v1026 = vsel %vm1025, %v1018, %v1022
        %v1027 = vand.u32 2147483647, %v987
        %vm1028 = vcmp.eq.f32.partialorder %v1027, 8.507059e+37
        %v1029 = vand.u32 %v987, 2147483648
        %v1030 = vor.u32 1.1754944e-38, %v1029
        %v1031 = vsel %vm1028, %v1030, %v1026
        %v1032 = vmul.f32 %v955, %v1031
        %v1033 = vrcp.pop %v989
        %v1034 = vmul.f32 %v989, %v1033
        %v1035 = vsub.f32 1.0, %v1034
        %v1036 = vmul.f32 %v1033, %v1035
        %v1037 = vadd.f32 %v1033, %v1036
        %vm1038 = vweird.f32 %v989
        %vm1039 = vweird.f32 %v1033
        %vm1040 = vmor %vm1038, %vm1039
        %v1041 = vsel %vm1040, %v1033, %v1037
        %v1042 = vand.u32 2147483647, %v989
        %vm1043 = vcmp.eq.f32.partialorder %v1042, 8.507059e+37
        %v1044 = vand.u32 %v989, 2147483648
        %v1045 = vor.u32 1.1754944e-38, %v1044
        %v1046 = vsel %vm1043, %v1045, %v1041
        %v1047 = vmul.f32 %v957, %v1046
        %v1048 = vrcp.pop %v991
        %v1049 = vmul.f32 %v991, %v1048
        %v1050 = vsub.f32 1.0, %v1049
        %v1051 = vmul.f32 %v1048, %v1050
        %v1052 = vadd.f32 %v1048, %v1051
        %vm1053 = vweird.f32 %v991
        %vm1054 = vweird.f32 %v1048
        %vm1055 = vmor %vm1053, %vm1054
        %v1056 = vsel %vm1055, %v1048, %v1052
        %v1057 = vand.u32 2147483647, %v991
        %vm1058 = vcmp.eq.f32.partialorder %v1057, 8.507059e+37
        %v1059 = vand.u32 %v991, 2147483648
        %v1060 = vor.u32 1.1754944e-38, %v1059
        %v1061 = vsel %vm1058, %v1060, %v1056
        %v1062 = vmul.f32 %v959, %v1061
        %v1063 = vrcp.pop %v993
        %v1064 = vmul.f32 %v993, %v1063
        %v1065 = vsub.f32 1.0, %v1064
        %v1066 = vmul.f32 %v1063, %v1065
        %v1067 = vadd.f32 %v1063, %v1066
        %vm1068 = vweird.f32 %v993
        %vm1069 = vweird.f32 %v1063
        %vm1070 = vmor %vm1068, %vm1069
        %v1071 = vsel %vm1070, %v1063, %v1067
        %v1072 = vand.u32 2147483647, %v993
        %vm1073 = vcmp.eq.f32.partialorder %v1072, 8.507059e+37
        %v1074 = vand.u32 %v993, 2147483648
        %v1075 = vor.u32 1.1754944e-38, %v1074
        %v1076 = vsel %vm1073, %v1075, %v1071
        %v1077 = vmul.f32 %v961, %v1076
        %v1078 = vrcp.pop %v995
        %v1079 = vmul.f32 %v995, %v1078
        %v1080 = vsub.f32 1.0, %v1079
        %v1081 = vmul.f32 %v1078, %v1080
        %v1082 = vadd.f32 %v1078, %v1081
        %vm1083 = vweird.f32 %v995
        %vm1084 = vweird.f32 %v1078
        %vm1085 = vmor %vm1083, %vm1084
        %v1086 = vsel %vm1085, %v1078, %v1082
        %v1087 = vand.u32 2147483647, %v995
        %vm1088 = vcmp.eq.f32.partialorder %v1087, 8.507059e+37
        %v1089 = vand.u32 %v995, 2147483648
        %v1090 = vor.u32 1.1754944e-38, %v1089
        %v1091 = vsel %vm1088, %v1090, %v1086
        %v1092 = vmul.f32 %v963, %v1091
        %v1093 = vrcp.pop %v997
        %v1094 = vmul.f32 %v997, %v1093
        %v1095 = vsub.f32 1.0, %v1094
        %v1096 = vmul.f32 %v1093, %v1095
        %v1097 = vadd.f32 %v1093, %v1096
        %vm1098 = vweird.f32 %v997
        %vm1099 = vweird.f32 %v1093
        %vm1100 = vmor %vm1098, %vm1099
        %v1101 = vsel %vm1100, %v1093, %v1097
        %v1102 = vand.u32 2147483647, %v997
        %vm1103 = vcmp.eq.f32.partialorder %v1102, 8.507059e+37
        %v1104 = vand.u32 %v997, 2147483648
        %v1105 = vor.u32 1.1754944e-38, %v1104
        %v1106 = vsel %vm1103, %v1105, %v1101
        %v1107 = vmul.f32 %v965, %v1106
        %v1108 = vrcp.pop %v999
        %v1109 = vmul.f32 %v999, %v1108
        %v1110 = vsub.f32 1.0, %v1109
        %v1111 = vmul.f32 %v1108, %v1110
        %v1112 = vadd.f32 %v1108, %v1111
        %vm1113 = vweird.f32 %v999
        %vm1114 = vweird.f32 %v1108
        %vm1115 = vmor %vm1113, %vm1114
        %v1116 = vsel %vm1115, %v1108, %v1112
        %v1117 = vand.u32 2147483647, %v999
        %vm1118 = vcmp.eq.f32.partialorder %v1117, 8.507059e+37
        %v1119 = vand.u32 %v999, 2147483648
        %v1120 = vor.u32 1.1754944e-38, %v1119
        %v1121 = vsel %vm1118, %v1120, %v1116
        %v1122 = vmul.f32 %v967, %v1121
        %v1123 = vrcp.pop %v1001
        %v1124 = vmul.f32 %v1001, %v1123
        %v1125 = vsub.f32 1.0, %v1124
        %v1126 = vmul.f32 %v1123, %v1125
        %v1127 = vadd.f32 %v1123, %v1126
        %vm1128 = vweird.f32 %v1001
        %vm1129 = vweird.f32 %v1123
        %vm1130 = vmor %vm1128, %vm1129
        %v1131 = vsel %vm1130, %v1123, %v1127
        %v1132 = vand.u32 2147483647, %v1001
        %vm1133 = vcmp.eq.f32.partialorder %v1132, 8.507059e+37
        %v1134 = vand.u32 %v1001, 2147483648
        %v1135 = vor.u32 1.1754944e-38, %v1134
        %v1136 = vsel %vm1133, %v1135, %v1131
        %v1137 = vmul.f32 %v969, %v1136
        %v1138 = vrcp.pop %v1003
        %v1139 = vmul.f32 %v1003, %v1138
        %v1140 = vsub.f32 1.0, %v1139
        %v1141 = vmul.f32 %v1138, %v1140
        %v1142 = vadd.f32 %v1138, %v1141
        %vm1143 = vweird.f32 %v1003
        %vm1144 = vweird.f32 %v1138
        %vm1145 = vmor %vm1143, %vm1144
        %v1146 = vsel %vm1145, %v1138, %v1142
        %v1147 = vand.u32 2147483647, %v1003
        %vm1148 = vcmp.eq.f32.partialorder %v1147, 8.507059e+37
        %v1149 = vand.u32 %v1003, 2147483648
        %v1150 = vor.u32 1.1754944e-38, %v1149
        %v1151 = vsel %vm1148, %v1150, %v1146
        %v1152 = vmul.f32 %v971, %v1151
        %v1153 = vrcp.pop %v1005
        %v1154 = vmul.f32 %v1005, %v1153
        %v1155 = vsub.f32 1.0, %v1154
        %v1156 = vmul.f32 %v1153, %v1155
        %v1157 = vadd.f32 %v1153, %v1156
        %vm1158 = vweird.f32 %v1005
        %vm1159 = vweird.f32 %v1153
        %vm1160 = vmor %vm1158, %vm1159
        %v1161 = vsel %vm1160, %v1153, %v1157
        %v1162 = vand.u32 2147483647, %v1005
        %vm1163 = vcmp.eq.f32.partialorder %v1162, 8.507059e+37
        %v1164 = vand.u32 %v1005, 2147483648
        %v1165 = vor.u32 1.1754944e-38, %v1164
        %v1166 = vsel %vm1163, %v1165, %v1161
        %v1167 = vmul.f32 %v973, %v1166
        %v1168 = vrcp.pop %v1007
        %v1169 = vmul.f32 %v1007, %v1168
        %v1170 = vsub.f32 1.0, %v1169
        %v1171 = vmul.f32 %v1168, %v1170
        %v1172 = vadd.f32 %v1168, %v1171
        %vm1173 = vweird.f32 %v1007
        %vm1174 = vweird.f32 %v1168
        %vm1175 = vmor %vm1173, %vm1174
        %v1176 = vsel %vm1175, %v1168, %v1172
        %v1177 = vand.u32 2147483647, %v1007
        %vm1178 = vcmp.eq.f32.partialorder %v1177, 8.507059e+37
        %v1179 = vand.u32 %v1007, 2147483648
        %v1180 = vor.u32 1.1754944e-38, %v1179
        %v1181 = vsel %vm1178, %v1180, %v1176
        %v1182 = vmul.f32 %v975, %v1181
        %v1183 = vrcp.pop %v1009
        %v1184 = vmul.f32 %v1009, %v1183
        %v1185 = vsub.f32 1.0, %v1184
        %v1186 = vmul.f32 %v1183, %v1185
        %v1187 = vadd.f32 %v1183, %v1186
        %vm1188 = vweird.f32 %v1009
        %vm1189 = vweird.f32 %v1183
        %vm1190 = vmor %vm1188, %vm1189
        %v1191 = vsel %vm1190, %v1183, %v1187
        %v1192 = vand.u32 2147483647, %v1009
        %vm1193 = vcmp.eq.f32.partialorder %v1192, 8.507059e+37
        %v1194 = vand.u32 %v1009, 2147483648
        %v1195 = vor.u32 1.1754944e-38, %v1194
        %v1196 = vsel %vm1193, %v1195, %v1191
        %v1197 = vmul.f32 %v977, %v1196
        %v1198 = vrcp.pop %v1011
        %v1199 = vmul.f32 %v1011, %v1198
        %v1200 = vsub.f32 1.0, %v1199
        %v1201 = vmul.f32 %v1198, %v1200
        %v1202 = vadd.f32 %v1198, %v1201
        %vm1203 = vweird.f32 %v1011
        %vm1204 = vweird.f32 %v1198
        %vm1205 = vmor %vm1203, %vm1204
        %v1206 = vsel %vm1205, %v1198, %v1202
        %v1207 = vand.u32 2147483647, %v1011
        %vm1208 = vcmp.eq.f32.partialorder %v1207, 8.507059e+37
        %v1209 = vand.u32 %v1011, 2147483648
        %v1210 = vor.u32 1.1754944e-38, %v1209
        %v1211 = vsel %vm1208, %v1210, %v1206
        %v1212 = vmul.f32 %v979, %v1211
        %v1213 = vrcp.pop %v1013
        %v1214 = vmul.f32 %v1013, %v1213
        %v1215 = vsub.f32 1.0, %v1214
        %v1216 = vmul.f32 %v1213, %v1215
        %v1217 = vadd.f32 %v1213, %v1216
        %vm1218 = vweird.f32 %v1013
        %vm1219 = vweird.f32 %v1213
        %vm1220 = vmor %vm1218, %vm1219
        %v1221 = vsel %vm1220, %v1213, %v1217
        %v1222 = vand.u32 2147483647, %v1013
        %vm1223 = vcmp.eq.f32.partialorder %v1222, 8.507059e+37
        %v1224 = vand.u32 %v1013, 2147483648
        %v1225 = vor.u32 1.1754944e-38, %v1224
        %v1226 = vsel %vm1223, %v1225, %v1221
        %v1227 = vmul.f32 %v981, %v1226
        %v1228 = vrcp.pop %v1015
        %v1229 = vmul.f32 %v1015, %v1228
        %v1230 = vsub.f32 1.0, %v1229
        %v1231 = vmul.f32 %v1228, %v1230
        %v1232 = vadd.f32 %v1228, %v1231
        %vm1233 = vweird.f32 %v1015
        %vm1234 = vweird.f32 %v1228
        %vm1235 = vmor %vm1233, %vm1234
        %v1236 = vsel %vm1235, %v1228, %v1232
        %v1237 = vand.u32 2147483647, %v1015
        %vm1238 = vcmp.eq.f32.partialorder %v1237, 8.507059e+37
        %v1239 = vand.u32 %v1015, 2147483648
        %v1240 = vor.u32 1.1754944e-38, %v1239
        %v1241 = vsel %vm1238, %v1240, %v1236
        %v1242 = vmul.f32 %v983, %v1241
        %v1243 = vrcp.pop %v1017
        %v1244 = vmul.f32 %v1017, %v1243
        %v1245 = vsub.f32 1.0, %v1244
        %v1246 = vmul.f32 %v1243, %v1245
        %v1247 = vadd.f32 %v1243, %v1246
        %vm1248 = vweird.f32 %v1017
        %vm1249 = vweird.f32 %v1243
        %vm1250 = vmor %vm1248, %vm1249
        %v1251 = vsel %vm1250, %v1243, %v1247
        %v1252 = vand.u32 2147483647, %v1017
        %vm1253 = vcmp.eq.f32.partialorder %v1252, 8.507059e+37
        %v1254 = vand.u32 %v1017, 2147483648
        %v1255 = vor.u32 1.1754944e-38, %v1254
        %v1256 = vsel %vm1253, %v1255, %v1251
        %v1257 = vmul.f32 %v985, %v1256
        %1258 = vst [vmem:[%s456] sm:$0xff] %v1032
        %1259 = vst [vmem:[%s456 + $0x8] sm:$0xff] %v1047
        %1260 = vst [vmem:[%s456 + $0x10] sm:$0xff] %v1062
        %1261 = vst [vmem:[%s456 + $0x18] sm:$0xff] %v1077
        %1262 = vst [vmem:[%s456 + $0x20] sm:$0xff] %v1092
        %1263 = vst [vmem:[%s456 + $0x28] sm:$0xff] %v1107
        %1264 = vst [vmem:[%s456 + $0x30] sm:$0xff] %v1122
        %1265 = vst [vmem:[%s456 + $0x38] sm:$0xff] %v1137
        %1266 = vst [vmem:[%s456 + $0x40] sm:$0xff] %v1152
        %1267 = vst [vmem:[%s456 + $0x48] sm:$0xff] %v1167
        %1268 = vst [vmem:[%s456 + $0x50] sm:$0xff] %v1182
        %1269 = vst [vmem:[%s456 + $0x58] sm:$0xff] %v1197
        %1270 = vst [vmem:[%s456 + $0x60] sm:$0xff] %v1212
        %1271 = vst [vmem:[%s456 + $0x68] sm:$0xff] %v1227
        %1272 = vst [vmem:[%s456 + $0x70] sm:$0xff] %v1242
        %1273 = vst [vmem:[%s456 + $0x78] sm:$0xff] %v1257
        %1274 = vmatpush.msra.mxu0 %v726
        %1275 = vmatpush.msra.mxu0 %v723
        %1276 = vmatpush.msra.mxu0 %v720
        %1277 = vmatpush.msra.mxu0 %v717
        %1278 = vmatpush.msra.mxu0 %v714
        %1279 = vmatpush.msra.mxu0 %v711
        %1280 = vmatpush.msra.mxu0 %v708
        %1281 = vmatpush.msra.mxu0 %v705
        %1282 = vmatpush.msra.mxu0 %v702
        %1283 = vmatpush.msra.mxu0 %v699
        %1284 = vmatpush.msra.mxu0 %v696
        %1285 = vmatpush.msra.mxu0 %v693
        %1286 = vmatpush.msra.mxu0 %v690
        %1287 = vmatpush.msra.mxu0 %v687
        %1288 = vmatpush.msra.mxu0 %v684
        %1289 = vmatpush.msra.mxu0 %v681
        %1290 = vmatmul.f32.gmra.mxu0 %v1032
        %v1291 = vpop.f32.mrf.mxu0
        %v1292 = vadd.f32 0.0, %v1291
        %1293 = vmatmul.f32.gmra.mxu0 %v1047
        %v1294 = vpop.f32.mrf.mxu0
        %v1295 = vadd.f32 0.0, %v1294
        %1296 = vmatmul.f32.gmra.mxu0 %v1062
        %v1297 = vpop.f32.mrf.mxu0
        %v1298 = vadd.f32 0.0, %v1297
        %1299 = vmatmul.f32.gmra.mxu0 %v1077
        %v1300 = vpop.f32.mrf.mxu0
        %v1301 = vadd.f32 0.0, %v1300
        %1302 = vmatmul.f32.gmra.mxu0 %v1092
        %v1303 = vpop.f32.mrf.mxu0
        %v1304 = vadd.f32 0.0, %v1303
        %1305 = vmatmul.f32.gmra.mxu0 %v1107
        %v1306 = vpop.f32.mrf.mxu0
        %v1307 = vadd.f32 0.0, %v1306
        %1308 = vmatmul.f32.gmra.mxu0 %v1122
        %v1309 = vpop.f32.mrf.mxu0
        %v1310 = vadd.f32 0.0, %v1309
        %1311 = vmatmul.f32.gmra.mxu0 %v1137
        %v1312 = vpop.f32.mrf.mxu0
        %v1313 = vadd.f32 0.0, %v1312
        %1314 = vmatmul.f32.gmra.mxu0 %v1152
        %v1315 = vpop.f32.mrf.mxu0
        %v1316 = vadd.f32 0.0, %v1315
        %1317 = vmatmul.f32.gmra.mxu0 %v1167
        %v1318 = vpop.f32.mrf.mxu0
        %v1319 = vadd.f32 0.0, %v1318
        %1320 = vmatmul.f32.gmra.mxu0 %v1182
        %v1321 = vpop.f32.mrf.mxu0
        %v1322 = vadd.f32 0.0, %v1321
        %1323 = vmatmul.f32.gmra.mxu0 %v1197
        %v1324 = vpop.f32.mrf.mxu0
        %v1325 = vadd.f32 0.0, %v1324
        %1326 = vmatmul.f32.gmra.mxu0 %v1212
        %v1327 = vpop.f32.mrf.mxu0
        %v1328 = vadd.f32 0.0, %v1327
        %1329 = vmatmul.f32.gmra.mxu0 %v1227
        %v1330 = vpop.f32.mrf.mxu0
        %v1331 = vadd.f32 0.0, %v1330
        %1332 = vmatmul.f32.gmra.mxu0 %v1242
        %v1333 = vpop.f32.mrf.mxu0
        %v1334 = vadd.f32 0.0, %v1333
        %1335 = vmatmul.f32.gmra.mxu0 %v1257
        %v1336 = vpop.f32.mrf.mxu0
        %v1337 = vadd.f32 0.0, %v1336
        %1338 = vdwg.mxu0
        %v1339 = vld [vmem:[#allocation10] sm:$0xff]
        %v1340 = vld [vmem:[#allocation10 + $0x8] sm:$0xff]
        %v1341 = vld [vmem:[#allocation10 + $0x10] sm:$0xff]
        %v1342 = vld [vmem:[#allocation10 + $0x18] sm:$0xff]
        %v1343 = vld [vmem:[#allocation10 + $0x20] sm:$0xff]
        %v1344 = vld [vmem:[#allocation10 + $0x28] sm:$0xff]
        %v1345 = vld [vmem:[#allocation10 + $0x30] sm:$0xff]
        %v1346 = vld [vmem:[#allocation10 + $0x38] sm:$0xff]
        %1347 = vrot.lane.b32.xlu0 %v511, 64
        %v1348 = vpop.permute.xlu0 %1347
        %1349 = vrot.lane.b32.xlu0 %v514, 64
        %v1350 = vpop.permute.xlu0 %1349
        %1351 = vrot.lane.b32.xlu0 %v517, 64
        %v1352 = vpop.permute.xlu0 %1351
        %1353 = vrot.lane.b32.xlu0 %v520, 64
        %v1354 = vpop.permute.xlu0 %1353
        %1355 = vrot.lane.b32.xlu0 %v523, 64
        %v1356 = vpop.permute.xlu0 %1355
        %1357 = vrot.lane.b32.xlu0 %v526, 64
        %v1358 = vpop.permute.xlu0 %1357
        %1359 = vrot.lane.b32.xlu0 %v529, 64
        %v1360 = vpop.permute.xlu0 %1359
        %1361 = vrot.lane.b32.xlu0 %v532, 64
        %v1362 = vpop.permute.xlu0 %1361
        %1363 = vrot.lane.b32.xlu0 %v535, 64
        %v1364 = vpop.permute.xlu0 %1363
        %1365 = vrot.lane.b32.xlu0 %v538, 64
        %v1366 = vpop.permute.xlu0 %1365
        %1367 = vrot.lane.b32.xlu0 %v541, 64
        %v1368 = vpop.permute.xlu0 %1367
        %1369 = vrot.lane.b32.xlu0 %v544, 64
        %v1370 = vpop.permute.xlu0 %1369
        %1371 = vrot.lane.b32.xlu0 %v547, 64
        %v1372 = vpop.permute.xlu0 %1371
        %1373 = vrot.lane.b32.xlu0 %v550, 64
        %v1374 = vpop.permute.xlu0 %1373
        %1375 = vrot.lane.b32.xlu0 %v553, 64
        %v1376 = vpop.permute.xlu0 %1375
        %1377 = vrot.lane.b32.xlu0 %v556, 64
        %v1378 = vpop.permute.xlu0 %1377
        %1379 = vrot.lane.b32.xlu0 %v596, 64
        %v1380 = vpop.permute.xlu0 %1379
        %1381 = vrot.lane.b32.xlu0 %v599, 64
        %v1382 = vpop.permute.xlu0 %1381
        %1383 = vrot.lane.b32.xlu0 %v602, 64
        %v1384 = vpop.permute.xlu0 %1383
        %1385 = vrot.lane.b32.xlu0 %v605, 64
        %v1386 = vpop.permute.xlu0 %1385
        %1387 = vrot.lane.b32.xlu0 %v608, 64
        %v1388 = vpop.permute.xlu0 %1387
        %1389 = vrot.lane.b32.xlu0 %v611, 64
        %v1390 = vpop.permute.xlu0 %1389
        %1391 = vrot.lane.b32.xlu0 %v614, 64
        %v1392 = vpop.permute.xlu0 %1391
        %1393 = vrot.lane.b32.xlu0 %v617, 64
        %v1394 = vpop.permute.xlu0 %1393
        %1395 = vrot.lane.b32.xlu0 %v620, 64
        %v1396 = vpop.permute.xlu0 %1395
        %1397 = vrot.lane.b32.xlu0 %v623, 64
        %v1398 = vpop.permute.xlu0 %1397
        %1399 = vrot.lane.b32.xlu0 %v626, 64
        %v1400 = vpop.permute.xlu0 %1399
        %1401 = vrot.lane.b32.xlu0 %v629, 64
        %v1402 = vpop.permute.xlu0 %1401
        %1403 = vrot.lane.b32.xlu0 %v632, 64
        %v1404 = vpop.permute.xlu0 %1403
        %1405 = vrot.lane.b32.xlu0 %v635, 64
        %v1406 = vpop.permute.xlu0 %1405
        %1407 = vrot.lane.b32.xlu0 %v638, 64
        %v1408 = vpop.permute.xlu0 %1407
        %1409 = vrot.lane.b32.xlu0 %v641, 64
        %v1410 = vpop.permute.xlu0 %1409
        %v1411 = vsel %vm728, %v1348, 0
        %v1413 = vsel %vm728, %v1350, 0
        %v1415 = vsel %vm728, %v1352, 0
        %v1417 = vsel %vm728, %v1354, 0
        %v1419 = vsel %vm728, %v1356, 0
        %v1421 = vsel %vm728, %v1358, 0
        %v1423 = vsel %vm728, %v1360, 0
        %v1425 = vsel %vm728, %v1362, 0
        %v1427 = vsel %vm728, %v1364, 0
        %v1429 = vsel %vm728, %v1366, 0
        %v1431 = vsel %vm728, %v1368, 0
        %v1433 = vsel %vm728, %v1370, 0
        %v1435 = vsel %vm728, %v1372, 0
        %v1437 = vsel %vm728, %v1374, 0
        %v1439 = vsel %vm728, %v1376, 0
        %v1441 = vsel %vm728, %v1378, 0
        %v1443 = vsel %vm728, %v1380, 0
        %v1445 = vsel %vm728, %v1382, 0
        %v1447 = vsel %vm728, %v1384, 0
        %v1449 = vsel %vm728, %v1386, 0
        %v1451 = vsel %vm728, %v1388, 0
        %v1453 = vsel %vm728, %v1390, 0
        %v1455 = vsel %vm728, %v1392, 0
        %v1457 = vsel %vm728, %v1394, 0
        %v1459 = vsel %vm728, %v1396, 0
        %v1461 = vsel %vm728, %v1398, 0
        %v1463 = vsel %vm728, %v1400, 0
        %v1465 = vsel %vm728, %v1402, 0
        %v1467 = vsel %vm728, %v1404, 0
        %v1469 = vsel %vm728, %v1406, 0
        %v1471 = vsel %vm728, %v1408, 0
        %v1473 = vsel %vm728, %v1410, 0
        %1475 = vmatpush.xpose.msra.mxu0 %v1473
        %1476 = vmatpush.xpose.msra.mxu0 %v1471
        %1477 = vmatpush.xpose.msra.mxu0 %v1469
        %1478 = vmatpush.xpose.msra.mxu0 %v1467
        %1479 = vmatpush.xpose.msra.mxu0 %v1465
        %1480 = vmatpush.xpose.msra.mxu0 %v1463
        %1481 = vmatpush.xpose.msra.mxu0 %v1461
        %1482 = vmatpush.xpose.msra.mxu0 %v1459
        %1483 = vmatpush.xpose.msra.mxu0 %v1457
        %1484 = vmatpush.xpose.msra.mxu0 %v1455
        %1485 = vmatpush.xpose.msra.mxu0 %v1453
        %1486 = vmatpush.xpose.msra.mxu0 %v1451
        %1487 = vmatpush.xpose.msra.mxu0 %v1449
        %1488 = vmatpush.xpose.msra.mxu0 %v1447
        %1489 = vmatpush.xpose.msra.mxu0 %v1445
        %1490 = vmatpush.xpose.msra.mxu0 %v1443
        %1491 = vmatmul.f32.gmra.mxu0 %v1411
        %v1492 = vpop.f32.mrf.mxu0
        %v1493 = vadd.f32 0.0, %v1492
        %1494 = vmatmul.f32.gmra.mxu0 %v1413
        %v1495 = vpop.f32.mrf.mxu0
        %v1496 = vadd.f32 0.0, %v1495
        %1497 = vmatmul.f32.gmra.mxu0 %v1415
        %v1498 = vpop.f32.mrf.mxu0
        %v1499 = vadd.f32 0.0, %v1498
        %1500 = vmatmul.f32.gmra.mxu0 %v1417
        %v1501 = vpop.f32.mrf.mxu0
        %v1502 = vadd.f32 0.0, %v1501
        %1503 = vmatmul.f32.gmra.mxu0 %v1419
        %v1504 = vpop.f32.mrf.mxu0
        %v1505 = vadd.f32 0.0, %v1504
        %1506 = vmatmul.f32.gmra.mxu0 %v1421
        %v1507 = vpop.f32.mrf.mxu0
        %v1508 = vadd.f32 0.0, %v1507
        %1509 = vmatmul.f32.gmra.mxu0 %v1423
        %v1510 = vpop.f32.mrf.mxu0
        %v1511 = vadd.f32 0.0, %v1510
        %1512 = vmatmul.f32.gmra.mxu0 %v1425
        %v1513 = vpop.f32.mrf.mxu0
        %v1514 = vadd.f32 0.0, %v1513
        %1515 = vmatmul.f32.gmra.mxu0 %v1427
        %v1516 = vpop.f32.mrf.mxu0
        %v1517 = vadd.f32 0.0, %v1516
        %1518 = vmatmul.f32.gmra.mxu0 %v1429
        %v1519 = vpop.f32.mrf.mxu0
        %v1520 = vadd.f32 0.0, %v1519
        %1521 = vmatmul.f32.gmra.mxu0 %v1431
        %v1522 = vpop.f32.mrf.mxu0
        %v1523 = vadd.f32 0.0, %v1522
        %1524 = vmatmul.f32.gmra.mxu0 %v1433
        %v1525 = vpop.f32.mrf.mxu0
        %v1526 = vadd.f32 0.0, %v1525
        %1527 = vmatmul.f32.gmra.mxu0 %v1435
        %v1528 = vpop.f32.mrf.mxu0
        %v1529 = vadd.f32 0.0, %v1528
        %1530 = vmatmul.f32.gmra.mxu0 %v1437
        %v1531 = vpop.f32.mrf.mxu0
        %v1532 = vadd.f32 0.0, %v1531
        %1533 = vmatmul.f32.gmra.mxu0 %v1439
        %v1534 = vpop.f32.mrf.mxu0
        %v1535 = vadd.f32 0.0, %v1534
        %1536 = vmatmul.f32.gmra.mxu0 %v1441
        %v1537 = vpop.f32.mrf.mxu0
        %v1538 = vadd.f32 0.0, %v1537
        %1539 = vdwg.mxu0
        %v1540 = vmul.f32 %v1493, 0.125
        %v1541 = vmul.f32 %v1496, 0.125
        %v1542 = vmul.f32 %v1499, 0.125
        %v1543 = vmul.f32 %v1502, 0.125
        %v1544 = vmul.f32 %v1505, 0.125
        %v1545 = vmul.f32 %v1508, 0.125
        %v1546 = vmul.f32 %v1511, 0.125
        %v1547 = vmul.f32 %v1514, 0.125
        %v1548 = vmul.f32 %v1517, 0.125
        %v1549 = vmul.f32 %v1520, 0.125
        %v1550 = vmul.f32 %v1523, 0.125
        %v1551 = vmul.f32 %v1526, 0.125
        %v1552 = vmul.f32 %v1529, 0.125
        %v1553 = vmul.f32 %v1532, 0.125
        %v1554 = vmul.f32 %v1535, 0.125
        %v1555 = vmul.f32 %v1538, 0.125
        %1556 = vmax.xlane.f32.xlu0 %v1540
        %v1557 = vpop.xlane.xlu0 %1556
        %1558 = vmax.xlane.f32.xlu0 %v1541
        %v1559 = vpop.xlane.xlu0 %1558
        %1560 = vmax.xlane.f32.xlu0 %v1542
        %v1561 = vpop.xlane.xlu0 %1560
        %1562 = vmax.xlane.f32.xlu0 %v1543
        %v1563 = vpop.xlane.xlu0 %1562
        %1564 = vmax.xlane.f32.xlu0 %v1544
        %v1565 = vpop.xlane.xlu0 %1564
        %1566 = vmax.xlane.f32.xlu0 %v1545
        %v1567 = vpop.xlane.xlu0 %1566
        %1568 = vmax.xlane.f32.xlu0 %v1546
        %v1569 = vpop.xlane.xlu0 %1568
        %1570 = vmax.xlane.f32.xlu0 %v1547
        %v1571 = vpop.xlane.xlu0 %1570
        %1572 = vmax.xlane.f32.xlu0 %v1548
        %v1573 = vpop.xlane.xlu0 %1572
        %1574 = vmax.xlane.f32.xlu0 %v1549
        %v1575 = vpop.xlane.xlu0 %1574
        %1576 = vmax.xlane.f32.xlu0 %v1550
        %v1577 = vpop.xlane.xlu0 %1576
        %1578 = vmax.xlane.f32.xlu0 %v1551
        %v1579 = vpop.xlane.xlu0 %1578
        %1580 = vmax.xlane.f32.xlu0 %v1552
        %v1581 = vpop.xlane.xlu0 %1580
        %1582 = vmax.xlane.f32.xlu0 %v1553
        %v1583 = vpop.xlane.xlu0 %1582
        %1584 = vmax.xlane.f32.xlu0 %v1554
        %v1585 = vpop.xlane.xlu0 %1584
        %1586 = vmax.xlane.f32.xlu0 %v1555
        %v1587 = vpop.xlane.xlu0 %1586
        %v1588 = vsub.f32 %v1540, %v1557
        %v1589 = vsub.f32 %v1541, %v1559
        %v1590 = vsub.f32 %v1542, %v1561
        %v1591 = vsub.f32 %v1543, %v1563
        %v1592 = vsub.f32 %v1544, %v1565
        %v1593 = vsub.f32 %v1545, %v1567
        %v1594 = vsub.f32 %v1546, %v1569
        %v1595 = vsub.f32 %v1547, %v1571
        %v1596 = vsub.f32 %v1548, %v1573
        %v1597 = vsub.f32 %v1549, %v1575
        %v1598 = vsub.f32 %v1550, %v1577
        %v1599 = vsub.f32 %v1551, %v1579
        %v1600 = vsub.f32 %v1552, %v1581
        %v1601 = vsub.f32 %v1553, %v1583
        %v1602 = vsub.f32 %v1554, %v1585
        %v1603 = vsub.f32 %v1555, %v1587
        %v1604 = vmul.f32 %v1588, 1.442695
        %v1605 = vpow.pop %v1604
        %v1606 = vmul.f32 %v1589, 1.442695
        %v1607 = vpow.pop %v1606
        %v1608 = vmul.f32 %v1590, 1.442695
        %v1609 = vpow.pop %v1608
        %v1610 = vmul.f32 %v1591, 1.442695
        %v1611 = vpow.pop %v1610
        %v1612 = vmul.f32 %v1592, 1.442695
        %v1613 = vpow.pop %v1612
        %v1614 = vmul.f32 %v1593, 1.442695
        %v1615 = vpow.pop %v1614
        %v1616 = vmul.f32 %v1594, 1.442695
        %v1617 = vpow.pop %v1616
        %v1618 = vmul.f32 %v1595, 1.442695
        %v1619 = vpow.pop %v1618
        %v1620 = vmul.f32 %v1596, 1.442695
        %v1621 = vpow.pop %v1620
        %v1622 = vmul.f32 %v1597, 1.442695
        %v1623 = vpow.pop %v1622
        %v1624 = vmul.f32 %v1598, 1.442695
        %v1625 = vpow.pop %v1624
        %v1626 = vmul.f32 %v1599, 1.442695
        %v1627 = vpow.pop %v1626
        %v1628 = vmul.f32 %v1600, 1.442695
        %v1629 = vpow.pop %v1628
        %v1630 = vmul.f32 %v1601, 1.442695
        %v1631 = vpow.pop %v1630
        %v1632 = vmul.f32 %v1602, 1.442695
        %v1633 = vpow.pop %v1632
        %v1634 = vmul.f32 %v1603, 1.442695
        %v1635 = vpow.pop %v1634
        %1636 = vadd.xlane.f32.xlu0 %v1605
        %v1637 = vpop.xlane.xlu0 %1636
        %1638 = vadd.xlane.f32.xlu0 %v1607
        %v1639 = vpop.xlane.xlu0 %1638
        %1640 = vadd.xlane.f32.xlu0 %v1609
        %v1641 = vpop.xlane.xlu0 %1640
        %1642 = vadd.xlane.f32.xlu0 %v1611
        %v1643 = vpop.xlane.xlu0 %1642
        %1644 = vadd.xlane.f32.xlu0 %v1613
        %v1645 = vpop.xlane.xlu0 %1644
        %1646 = vadd.xlane.f32.xlu0 %v1615
        %v1647 = vpop.xlane.xlu0 %1646
        %1648 = vadd.xlane.f32.xlu0 %v1617
        %v1649 = vpop.xlane.xlu0 %1648
        %1650 = vadd.xlane.f32.xlu0 %v1619
        %v1651 = vpop.xlane.xlu0 %1650
        %1652 = vadd.xlane.f32.xlu0 %v1621
        %v1653 = vpop.xlane.xlu0 %1652
        %1654 = vadd.xlane.f32.xlu0 %v1623
        %v1655 = vpop.xlane.xlu0 %1654
        %1656 = vadd.xlane.f32.xlu0 %v1625
        %v1657 = vpop.xlane.xlu0 %1656
        %1658 = vadd.xlane.f32.xlu0 %v1627
        %v1659 = vpop.xlane.xlu0 %1658
        %1660 = vadd.xlane.f32.xlu0 %v1629
        %v1661 = vpop.xlane.xlu0 %1660
        %1662 = vadd.xlane.f32.xlu0 %v1631
        %v1663 = vpop.xlane.xlu0 %1662
        %1664 = vadd.xlane.f32.xlu0 %v1633
        %v1665 = vpop.xlane.xlu0 %1664
        %1666 = vadd.xlane.f32.xlu0 %v1635
        %v1667 = vpop.xlane.xlu0 %1666
        %v1668 = vrcp.pop %v1637
        %v1669 = vmul.f32 %v1637, %v1668
        %v1670 = vsub.f32 1.0, %v1669
        %v1671 = vmul.f32 %v1668, %v1670
        %v1672 = vadd.f32 %v1668, %v1671
        %vm1673 = vweird.f32 %v1637
        %vm1674 = vweird.f32 %v1668
        %vm1675 = vmor %vm1673, %vm1674
        %v1676 = vsel %vm1675, %v1668, %v1672
        %v1677 = vand.u32 2147483647, %v1637
        %vm1678 = vcmp.eq.f32.partialorder %v1677, 8.507059e+37
        %v1679 = vand.u32 %v1637, 2147483648
        %v1680 = vor.u32 1.1754944e-38, %v1679
        %v1681 = vsel %vm1678, %v1680, %v1676
        %v1682 = vmul.f32 %v1605, %v1681
        %v1683 = vrcp.pop %v1639
        %v1684 = vmul.f32 %v1639, %v1683
        %v1685 = vsub.f32 1.0, %v1684
        %v1686 = vmul.f32 %v1683, %v1685
        %v1687 = vadd.f32 %v1683, %v1686
        %vm1688 = vweird.f32 %v1639
        %vm1689 = vweird.f32 %v1683
        %vm1690 = vmor %vm1688, %vm1689
        %v1691 = vsel %vm1690, %v1683, %v1687
        %v1692 = vand.u32 2147483647, %v1639
        %vm1693 = vcmp.eq.f32.partialorder %v1692, 8.507059e+37
        %v1694 = vand.u32 %v1639, 2147483648
        %v1695 = vor.u32 1.1754944e-38, %v1694
        %v1696 = vsel %vm1693, %v1695, %v1691
        %v1697 = vmul.f32 %v1607, %v1696
        %v1698 = vrcp.pop %v1641
        %v1699 = vmul.f32 %v1641, %v1698
        %v1700 = vsub.f32 1.0, %v1699
        %v1701 = vmul.f32 %v1698, %v1700
        %v1702 = vadd.f32 %v1698, %v1701
        %vm1703 = vweird.f32 %v1641
        %vm1704 = vweird.f32 %v1698
        %vm1705 = vmor %vm1703, %vm1704
        %v1706 = vsel %vm1705, %v1698, %v1702
        %v1707 = vand.u32 2147483647, %v1641
        %vm1708 = vcmp.eq.f32.partialorder %v1707, 8.507059e+37
        %v1709 = vand.u32 %v1641, 2147483648
        %v1710 = vor.u32 1.1754944e-38, %v1709
        %v1711 = vsel %vm1708, %v1710, %v1706
        %v1712 = vmul.f32 %v1609, %v1711
        %v1713 = vrcp.pop %v1643
        %v1714 = vmul.f32 %v1643, %v1713
        %v1715 = vsub.f32 1.0, %v1714
        %v1716 = vmul.f32 %v1713, %v1715
        %v1717 = vadd.f32 %v1713, %v1716
        %vm1718 = vweird.f32 %v1643
        %vm1719 = vweird.f32 %v1713
        %vm1720 = vmor %vm1718, %vm1719
        %v1721 = vsel %vm1720, %v1713, %v1717
        %v1722 = vand.u32 2147483647, %v1643
        %vm1723 = vcmp.eq.f32.partialorder %v1722, 8.507059e+37
        %v1724 = vand.u32 %v1643, 2147483648
        %v1725 = vor.u32 1.1754944e-38, %v1724
        %v1726 = vsel %vm1723, %v1725, %v1721
        %v1727 = vmul.f32 %v1611, %v1726
        %v1728 = vrcp.pop %v1645
        %v1729 = vmul.f32 %v1645, %v1728
        %v1730 = vsub.f32 1.0, %v1729
        %v1731 = vmul.f32 %v1728, %v1730
        %v1732 = vadd.f32 %v1728, %v1731
        %vm1733 = vweird.f32 %v1645
        %vm1734 = vweird.f32 %v1728
        %vm1735 = vmor %vm1733, %vm1734
        %v1736 = vsel %vm1735, %v1728, %v1732
        %v1737 = vand.u32 2147483647, %v1645
        %vm1738 = vcmp.eq.f32.partialorder %v1737, 8.507059e+37
        %v1739 = vand.u32 %v1645, 2147483648
        %v1740 = vor.u32 1.1754944e-38, %v1739
        %v1741 = vsel %vm1738, %v1740, %v1736
        %v1742 = vmul.f32 %v1613, %v1741
        %v1743 = vrcp.pop %v1647
        %v1744 = vmul.f32 %v1647, %v1743
        %v1745 = vsub.f32 1.0, %v1744
        %v1746 = vmul.f32 %v1743, %v1745
        %v1747 = vadd.f32 %v1743, %v1746
        %vm1748 = vweird.f32 %v1647
        %vm1749 = vweird.f32 %v1743
        %vm1750 = vmor %vm1748, %vm1749
        %v1751 = vsel %vm1750, %v1743, %v1747
        %v1752 = vand.u32 2147483647, %v1647
        %vm1753 = vcmp.eq.f32.partialorder %v1752, 8.507059e+37
        %v1754 = vand.u32 %v1647, 2147483648
        %v1755 = vor.u32 1.1754944e-38, %v1754
        %v1756 = vsel %vm1753, %v1755, %v1751
        %v1757 = vmul.f32 %v1615, %v1756
        %v1758 = vrcp.pop %v1649
        %v1759 = vmul.f32 %v1649, %v1758
        %v1760 = vsub.f32 1.0, %v1759
        %v1761 = vmul.f32 %v1758, %v1760
        %v1762 = vadd.f32 %v1758, %v1761
        %vm1763 = vweird.f32 %v1649
        %vm1764 = vweird.f32 %v1758
        %vm1765 = vmor %vm1763, %vm1764
        %v1766 = vsel %vm1765, %v1758, %v1762
        %v1767 = vand.u32 2147483647, %v1649
        %vm1768 = vcmp.eq.f32.partialorder %v1767, 8.507059e+37
        %v1769 = vand.u32 %v1649, 2147483648
        %v1770 = vor.u32 1.1754944e-38, %v1769
        %v1771 = vsel %vm1768, %v1770, %v1766
        %v1772 = vmul.f32 %v1617, %v1771
        %v1773 = vrcp.pop %v1651
        %v1774 = vmul.f32 %v1651, %v1773
        %v1775 = vsub.f32 1.0, %v1774
        %v1776 = vmul.f32 %v1773, %v1775
        %v1777 = vadd.f32 %v1773, %v1776
        %vm1778 = vweird.f32 %v1651
        %vm1779 = vweird.f32 %v1773
        %vm1780 = vmor %vm1778, %vm1779
        %v1781 = vsel %vm1780, %v1773, %v1777
        %v1782 = vand.u32 2147483647, %v1651
        %vm1783 = vcmp.eq.f32.partialorder %v1782, 8.507059e+37
        %v1784 = vand.u32 %v1651, 2147483648
        %v1785 = vor.u32 1.1754944e-38, %v1784
        %v1786 = vsel %vm1783, %v1785, %v1781
        %v1787 = vmul.f32 %v1619, %v1786
        %v1788 = vrcp.pop %v1653
        %v1789 = vmul.f32 %v1653, %v1788
        %v1790 = vsub.f32 1.0, %v1789
        %v1791 = vmul.f32 %v1788, %v1790
        %v1792 = vadd.f32 %v1788, %v1791
        %vm1793 = vweird.f32 %v1653
        %vm1794 = vweird.f32 %v1788
        %vm1795 = vmor %vm1793, %vm1794
        %v1796 = vsel %vm1795, %v1788, %v1792
        %v1797 = vand.u32 2147483647, %v1653
        %vm1798 = vcmp.eq.f32.partialorder %v1797, 8.507059e+37
        %v1799 = vand.u32 %v1653, 2147483648
        %v1800 = vor.u32 1.1754944e-38, %v1799
        %v1801 = vsel %vm1798, %v1800, %v1796
        %v1802 = vmul.f32 %v1621, %v1801
        %v1803 = vrcp.pop %v1655
        %v1804 = vmul.f32 %v1655, %v1803
        %v1805 = vsub.f32 1.0, %v1804
        %v1806 = vmul.f32 %v1803, %v1805
        %v1807 = vadd.f32 %v1803, %v1806
        %vm1808 = vweird.f32 %v1655
        %vm1809 = vweird.f32 %v1803
        %vm1810 = vmor %vm1808, %vm1809
        %v1811 = vsel %vm1810, %v1803, %v1807
        %v1812 = vand.u32 2147483647, %v1655
        %vm1813 = vcmp.eq.f32.partialorder %v1812, 8.507059e+37
        %v1814 = vand.u32 %v1655, 2147483648
        %v1815 = vor.u32 1.1754944e-38, %v1814
        %v1816 = vsel %vm1813, %v1815, %v1811
        %v1817 = vmul.f32 %v1623, %v1816
        %v1818 = vrcp.pop %v1657
        %v1819 = vmul.f32 %v1657, %v1818
        %v1820 = vsub.f32 1.0, %v1819
        %v1821 = vmul.f32 %v1818, %v1820
        %v1822 = vadd.f32 %v1818, %v1821
        %vm1823 = vweird.f32 %v1657
        %vm1824 = vweird.f32 %v1818
        %vm1825 = vmor %vm1823, %vm1824
        %v1826 = vsel %vm1825, %v1818, %v1822
        %v1827 = vand.u32 2147483647, %v1657
        %vm1828 = vcmp.eq.f32.partialorder %v1827, 8.507059e+37
        %v1829 = vand.u32 %v1657, 2147483648
        %v1830 = vor.u32 1.1754944e-38, %v1829
        %v1831 = vsel %vm1828, %v1830, %v1826
        %v1832 = vmul.f32 %v1625, %v1831
        %v1833 = vrcp.pop %v1659
        %v1834 = vmul.f32 %v1659, %v1833
        %v1835 = vsub.f32 1.0, %v1834
        %v1836 = vmul.f32 %v1833, %v1835
        %v1837 = vadd.f32 %v1833, %v1836
        %vm1838 = vweird.f32 %v1659
        %vm1839 = vweird.f32 %v1833
        %vm1840 = vmor %vm1838, %vm1839
        %v1841 = vsel %vm1840, %v1833, %v1837
        %v1842 = vand.u32 2147483647, %v1659
        %vm1843 = vcmp.eq.f32.partialorder %v1842, 8.507059e+37
        %v1844 = vand.u32 %v1659, 2147483648
        %v1845 = vor.u32 1.1754944e-38, %v1844
        %v1846 = vsel %vm1843, %v1845, %v1841
        %v1847 = vmul.f32 %v1627, %v1846
        %v1848 = vrcp.pop %v1661
        %v1849 = vmul.f32 %v1661, %v1848
        %v1850 = vsub.f32 1.0, %v1849
        %v1851 = vmul.f32 %v1848, %v1850
        %v1852 = vadd.f32 %v1848, %v1851
        %vm1853 = vweird.f32 %v1661
        %vm1854 = vweird.f32 %v1848
        %vm1855 = vmor %vm1853, %vm1854
        %v1856 = vsel %vm1855, %v1848, %v1852
        %v1857 = vand.u32 2147483647, %v1661
        %vm1858 = vcmp.eq.f32.partialorder %v1857, 8.507059e+37
        %v1859 = vand.u32 %v1661, 2147483648
        %v1860 = vor.u32 1.1754944e-38, %v1859
        %v1861 = vsel %vm1858, %v1860, %v1856
        %v1862 = vmul.f32 %v1629, %v1861
        %v1863 = vrcp.pop %v1663
        %v1864 = vmul.f32 %v1663, %v1863
        %v1865 = vsub.f32 1.0, %v1864
        %v1866 = vmul.f32 %v1863, %v1865
        %v1867 = vadd.f32 %v1863, %v1866
        %vm1868 = vweird.f32 %v1663
        %vm1869 = vweird.f32 %v1863
        %vm1870 = vmor %vm1868, %vm1869
        %v1871 = vsel %vm1870, %v1863, %v1867
        %v1872 = vand.u32 2147483647, %v1663
        %vm1873 = vcmp.eq.f32.partialorder %v1872, 8.507059e+37
        %v1874 = vand.u32 %v1663, 2147483648
        %v1875 = vor.u32 1.1754944e-38, %v1874
        %v1876 = vsel %vm1873, %v1875, %v1871
        %v1877 = vmul.f32 %v1631, %v1876
        %v1878 = vrcp.pop %v1665
        %v1879 = vmul.f32 %v1665, %v1878
        %v1880 = vsub.f32 1.0, %v1879
        %v1881 = vmul.f32 %v1878, %v1880
        %v1882 = vadd.f32 %v1878, %v1881
        %vm1883 = vweird.f32 %v1665
        %vm1884 = vweird.f32 %v1878
        %vm1885 = vmor %vm1883, %vm1884
        %v1886 = vsel %vm1885, %v1878, %v1882
        %v1887 = vand.u32 2147483647, %v1665
        %vm1888 = vcmp.eq.f32.partialorder %v1887, 8.507059e+37
        %v1889 = vand.u32 %v1665, 2147483648
        %v1890 = vor.u32 1.1754944e-38, %v1889
        %v1891 = vsel %vm1888, %v1890, %v1886
        %v1892 = vmul.f32 %v1633, %v1891
        %v1893 = vrcp.pop %v1667
        %v1894 = vmul.f32 %v1667, %v1893
        %v1895 = vsub.f32 1.0, %v1894
        %v1896 = vmul.f32 %v1893, %v1895
        %v1897 = vadd.f32 %v1893, %v1896
        %vm1898 = vweird.f32 %v1667
        %vm1899 = vweird.f32 %v1893
        %vm1900 = vmor %vm1898, %vm1899
        %v1901 = vsel %vm1900, %v1893, %v1897
        %v1902 = vand.u32 2147483647, %v1667
        %vm1903 = vcmp.eq.f32.partialorder %v1902, 8.507059e+37
        %v1904 = vand.u32 %v1667, 2147483648
        %v1905 = vor.u32 1.1754944e-38, %v1904
        %v1906 = vsel %vm1903, %v1905, %v1901
        %v1907 = vmul.f32 %v1635, %v1906
        %s1908 = scalar_lea.vmem %s456, 128 [#allocation12]
        %1909 = vst [vmem:[%s1908] sm:$0xff] %v1682
        %1910 = vst [vmem:[%s1908 + $0x8] sm:$0xff] %v1697
        %1911 = vst [vmem:[%s1908 + $0x10] sm:$0xff] %v1712
        %1912 = vst [vmem:[%s1908 + $0x18] sm:$0xff] %v1727
        %1913 = vst [vmem:[%s1908 + $0x20] sm:$0xff] %v1742
        %1914 = vst [vmem:[%s1908 + $0x28] sm:$0xff] %v1757
        %1915 = vst [vmem:[%s1908 + $0x30] sm:$0xff] %v1772
        %1916 = vst [vmem:[%s1908 + $0x38] sm:$0xff] %v1787
        %1917 = vst [vmem:[%s1908 + $0x40] sm:$0xff] %v1802
        %1918 = vst [vmem:[%s1908 + $0x48] sm:$0xff] %v1817
        %1919 = vst [vmem:[%s1908 + $0x50] sm:$0xff] %v1832
        %1920 = vst [vmem:[%s1908 + $0x58] sm:$0xff] %v1847
        %1921 = vst [vmem:[%s1908 + $0x60] sm:$0xff] %v1862
        %1922 = vst [vmem:[%s1908 + $0x68] sm:$0xff] %v1877
        %1923 = vst [vmem:[%s1908 + $0x70] sm:$0xff] %v1892
        %1924 = vst [vmem:[%s1908 + $0x78] sm:$0xff] %v1907
        %1941 = vrot.lane.b32.xlu0 %v681, 64
        %v1942 = vpop.permute.xlu0 %1941
        %1943 = vrot.lane.b32.xlu0 %v684, 64
        %v1944 = vpop.permute.xlu0 %1943
        %1945 = vrot.lane.b32.xlu0 %v687, 64
        %v1946 = vpop.permute.xlu0 %1945
        %1947 = vrot.lane.b32.xlu0 %v690, 64
        %v1948 = vpop.permute.xlu0 %1947
        %1949 = vrot.lane.b32.xlu0 %v693, 64
        %v1950 = vpop.permute.xlu0 %1949
        %1951 = vrot.lane.b32.xlu0 %v696, 64
        %v1952 = vpop.permute.xlu0 %1951
        %1953 = vrot.lane.b32.xlu0 %v699, 64
        %v1954 = vpop.permute.xlu0 %1953
        %1955 = vrot.lane.b32.xlu0 %v702, 64
        %v1956 = vpop.permute.xlu0 %1955
        %1957 = vrot.lane.b32.xlu0 %v705, 64
        %v1958 = vpop.permute.xlu0 %1957
        %1959 = vrot.lane.b32.xlu0 %v708, 64
        %v1960 = vpop.permute.xlu0 %1959
        %1961 = vrot.lane.b32.xlu0 %v711, 64
        %v1962 = vpop.permute.xlu0 %1961
        %1963 = vrot.lane.b32.xlu0 %v714, 64
        %v1964 = vpop.permute.xlu0 %1963
        %1965 = vrot.lane.b32.xlu0 %v717, 64
        %v1966 = vpop.permute.xlu0 %1965
        %1967 = vrot.lane.b32.xlu0 %v720, 64
        %v1968 = vpop.permute.xlu0 %1967
        %1969 = vrot.lane.b32.xlu0 %v723, 64
        %v1970 = vpop.permute.xlu0 %1969
        %1971 = vrot.lane.b32.xlu0 %v726, 64
        %v1972 = vpop.permute.xlu0 %1971
        %1989 = vmatpush.msra.mxu0 %v1972
        %1990 = vmatpush.msra.mxu0 %v1970
        %1991 = vmatpush.msra.mxu0 %v1968
        %1992 = vmatpush.msra.mxu0 %v1966
        %1993 = vmatpush.msra.mxu0 %v1964
        %1994 = vmatpush.msra.mxu0 %v1962
        %1995 = vmatpush.msra.mxu0 %v1960
        %1996 = vmatpush.msra.mxu0 %v1958
        %1997 = vmatpush.msra.mxu0 %v1956
        %1998 = vmatpush.msra.mxu0 %v1954
        %1999 = vmatpush.msra.mxu0 %v1952
        %2000 = vmatpush.msra.mxu0 %v1950
        %2001 = vmatpush.msra.mxu0 %v1948
        %2002 = vmatpush.msra.mxu0 %v1946
        %2003 = vmatpush.msra.mxu0 %v1944
        %2004 = vmatpush.msra.mxu0 %v1942
        %2005 = vmatmul.f32.gmra.mxu0 %v1682
        %v2006 = vpop.f32.mrf.mxu0
        %v2007 = vadd.f32 0.0, %v2006
        %2008 = vmatmul.f32.gmra.mxu0 %v1697
        %v2009 = vpop.f32.mrf.mxu0
        %v2010 = vadd.f32 0.0, %v2009
        %2011 = vmatmul.f32.gmra.mxu0 %v1712
        %v2012 = vpop.f32.mrf.mxu0
        %v2013 = vadd.f32 0.0, %v2012
        %2014 = vmatmul.f32.gmra.mxu0 %v1727
        %v2015 = vpop.f32.mrf.mxu0
        %v2016 = vadd.f32 0.0, %v2015
        %2017 = vmatmul.f32.gmra.mxu0 %v1742
        %v2018 = vpop.f32.mrf.mxu0
        %v2019 = vadd.f32 0.0, %v2018
        %2020 = vmatmul.f32.gmra.mxu0 %v1757
        %v2021 = vpop.f32.mrf.mxu0
        %v2022 = vadd.f32 0.0, %v2021
        %2023 = vmatmul.f32.gmra.mxu0 %v1772
        %v2024 = vpop.f32.mrf.mxu0
        %v2025 = vadd.f32 0.0, %v2024
        %2026 = vmatmul.f32.gmra.mxu0 %v1787
        %v2027 = vpop.f32.mrf.mxu0
        %v2028 = vadd.f32 0.0, %v2027
        %2029 = vmatmul.f32.gmra.mxu0 %v1802
        %v2030 = vpop.f32.mrf.mxu0
        %v2031 = vadd.f32 0.0, %v2030
        %2032 = vmatmul.f32.gmra.mxu0 %v1817
        %v2033 = vpop.f32.mrf.mxu0
        %v2034 = vadd.f32 0.0, %v2033
        %2035 = vmatmul.f32.gmra.mxu0 %v1832
        %v2036 = vpop.f32.mrf.mxu0
        %v2037 = vadd.f32 0.0, %v2036
        %2038 = vmatmul.f32.gmra.mxu0 %v1847
        %v2039 = vpop.f32.mrf.mxu0
        %v2040 = vadd.f32 0.0, %v2039
        %2041 = vmatmul.f32.gmra.mxu0 %v1862
        %v2042 = vpop.f32.mrf.mxu0
        %v2043 = vadd.f32 0.0, %v2042
        %2044 = vmatmul.f32.gmra.mxu0 %v1877
        %v2045 = vpop.f32.mrf.mxu0
        %v2046 = vadd.f32 0.0, %v2045
        %2047 = vmatmul.f32.gmra.mxu0 %v1892
        %v2048 = vpop.f32.mrf.mxu0
        %v2049 = vadd.f32 0.0, %v2048
        %2050 = vmatmul.f32.gmra.mxu0 %v1907
        %v2051 = vpop.f32.mrf.mxu0
        %v2052 = vadd.f32 0.0, %v2051
        %2053 = vdwg.mxu0
        %v2054 = vld [vmem:[#allocation10 + $0x40] sm:$0xff]
        %v2055 = vld [vmem:[#allocation10 + $0x48] sm:$0xff]
        %v2056 = vld [vmem:[#allocation10 + $0x50] sm:$0xff]
        %v2057 = vld [vmem:[#allocation10 + $0x58] sm:$0xff]
        %v2058 = vld [vmem:[#allocation10 + $0x60] sm:$0xff]
        %v2059 = vld [vmem:[#allocation10 + $0x68] sm:$0xff]
        %v2060 = vld [vmem:[#allocation10 + $0x70] sm:$0xff]
        %v2061 = vld [vmem:[#allocation10 + $0x78] sm:$0xff]
        %v2063 = vsel %vm728, %v2007, 0
        %v2066 = vsel %vm728, %v2010, 0
        %v2069 = vsel %vm728, %v2013, 0
        %v2072 = vsel %vm728, %v2016, 0
        %v2075 = vsel %vm728, %v2019, 0
        %v2078 = vsel %vm728, %v2022, 0
        %v2081 = vsel %vm728, %v2025, 0
        %v2084 = vsel %vm728, %v2028, 0
        %v2087 = vsel %vm728, %v2031, 0
        %v2090 = vsel %vm728, %v2034, 0
        %v2093 = vsel %vm728, %v2037, 0
        %v2096 = vsel %vm728, %v2040, 0
        %v2099 = vsel %vm728, %v2043, 0
        %v2102 = vsel %vm728, %v2046, 0
        %v2105 = vsel %vm728, %v2049, 0
        %v2108 = vsel %vm728, %v2052, 0
        %2110 = vmatpush.msra.mxu0 0.0
        %2111 = vmatpush.msra.mxu0 0.0
        %2112 = vmatpush.msra.mxu0 0.0
        %2113 = vmatpush.msra.mxu0 0.0
        %2114 = vmatpush.msra.mxu0 0.0
        %2115 = vmatpush.msra.mxu0 0.0
        %2116 = vmatpush.msra.mxu0 0.0
        %2117 = vmatpush.msra.mxu0 0.0
        %2118 = vmatpush.msra.mxu0 %v2061
        %2119 = vmatpush.msra.mxu0 %v2060
        %2120 = vmatpush.msra.mxu0 %v2059
        %2121 = vmatpush.msra.mxu0 %v2058
        %2122 = vmatpush.msra.mxu0 %v2057
        %2123 = vmatpush.msra.mxu0 %v2056
        %2124 = vmatpush.msra.mxu0 %v2055
        %2125 = vmatpush.msra.mxu0 %v2054
        %2126 = vmatmul.f32.gmra.mxu0 %v2063
        %v2127 = vpop.f32.mrf.mxu0
        %v2128 = vadd.f32 0.0, %v2127
        %2129 = vmatmul.f32.gmra.mxu0 %v2066
        %v2130 = vpop.f32.mrf.mxu0
        %v2131 = vadd.f32 0.0, %v2130
        %2132 = vmatmul.f32.gmra.mxu0 %v2069
        %v2133 = vpop.f32.mrf.mxu0
        %v2134 = vadd.f32 0.0, %v2133
        %2135 = vmatmul.f32.gmra.mxu0 %v2072
        %v2136 = vpop.f32.mrf.mxu0
        %v2137 = vadd.f32 0.0, %v2136
        %2138 = vmatmul.f32.gmra.mxu0 %v2075
        %v2139 = vpop.f32.mrf.mxu0
        %v2140 = vadd.f32 0.0, %v2139
        %2141 = vmatmul.f32.gmra.mxu0 %v2078
        %v2142 = vpop.f32.mrf.mxu0
        %v2143 = vadd.f32 0.0, %v2142
        %2144 = vmatmul.f32.gmra.mxu0 %v2081
        %v2145 = vpop.f32.mrf.mxu0
        %v2146 = vadd.f32 0.0, %v2145
        %2147 = vmatmul.f32.gmra.mxu0 %v2084
        %v2148 = vpop.f32.mrf.mxu0
        %v2149 = vadd.f32 0.0, %v2148
        %2150 = vmatmul.f32.gmra.mxu0 %v2087
        %v2151 = vpop.f32.mrf.mxu0
        %v2152 = vadd.f32 0.0, %v2151
        %2153 = vmatmul.f32.gmra.mxu0 %v2090
        %v2154 = vpop.f32.mrf.mxu0
        %v2155 = vadd.f32 0.0, %v2154
        %2156 = vmatmul.f32.gmra.mxu0 %v2093
        %v2157 = vpop.f32.mrf.mxu0
        %v2158 = vadd.f32 0.0, %v2157
        %2159 = vmatmul.f32.gmra.mxu0 %v2096
        %v2160 = vpop.f32.mrf.mxu0
        %v2161 = vadd.f32 0.0, %v2160
        %2162 = vmatmul.f32.gmra.mxu0 %v2099
        %v2163 = vpop.f32.mrf.mxu0
        %v2164 = vadd.f32 0.0, %v2163
        %2165 = vmatmul.f32.gmra.mxu0 %v2102
        %v2166 = vpop.f32.mrf.mxu0
        %v2167 = vadd.f32 0.0, %v2166
        %2168 = vmatmul.f32.gmra.mxu0 %v2105
        %v2169 = vpop.f32.mrf.mxu0
        %v2170 = vadd.f32 0.0, %v2169
        %2171 = vmatmul.f32.gmra.mxu0 %v2108
        %v2172 = vpop.f32.mrf.mxu0
        %v2173 = vadd.f32 0.0, %v2172
        %2174 = vdwg.mxu0
        %v2176 = vsel %vm728, %v1292, 0
        %v2179 = vsel %vm728, %v1295, 0
        %v2182 = vsel %vm728, %v1298, 0
        %v2185 = vsel %vm728, %v1301, 0
        %v2188 = vsel %vm728, %v1304, 0
        %v2191 = vsel %vm728, %v1307, 0
        %v2194 = vsel %vm728, %v1310, 0
        %v2197 = vsel %vm728, %v1313, 0
        %v2200 = vsel %vm728, %v1316, 0
        %v2203 = vsel %vm728, %v1319, 0
        %v2206 = vsel %vm728, %v1322, 0
        %v2209 = vsel %vm728, %v1325, 0
        %v2212 = vsel %vm728, %v1328, 0
        %v2215 = vsel %vm728, %v1331, 0
        %v2218 = vsel %vm728, %v1334, 0
        %v2221 = vsel %vm728, %v1337, 0
        %2223 = vmatpush.msra.mxu0 0.0
        %2224 = vmatpush.msra.mxu0 0.0
        %2225 = vmatpush.msra.mxu0 0.0
        %2226 = vmatpush.msra.mxu0 0.0
        %2227 = vmatpush.msra.mxu0 0.0
        %2228 = vmatpush.msra.mxu0 0.0
        %2229 = vmatpush.msra.mxu0 0.0
        %2230 = vmatpush.msra.mxu0 0.0
        %2231 = vmatpush.msra.mxu0 %v1346
        %2232 = vmatpush.msra.mxu0 %v1345
        %2233 = vmatpush.msra.mxu0 %v1344
        %2234 = vmatpush.msra.mxu0 %v1343
        %2235 = vmatpush.msra.mxu0 %v1342
        %2236 = vmatpush.msra.mxu0 %v1341
        %2237 = vmatpush.msra.mxu0 %v1340
        %2238 = vmatpush.msra.mxu0 %v1339
        %2239 = vmatmul.f32.gmra.mxu0 %v2176
        %v2240 = vpop.f32.mrf.mxu0
        %v2241 = vadd.f32 %v2128, %v2240
        %2242 = vmatmul.f32.gmra.mxu0 %v2179
        %v2243 = vpop.f32.mrf.mxu0
        %v2244 = vadd.f32 %v2131, %v2243
        %2245 = vmatmul.f32.gmra.mxu0 %v2182
        %v2246 = vpop.f32.mrf.mxu0
        %v2247 = vadd.f32 %v2134, %v2246
        %2248 = vmatmul.f32.gmra.mxu0 %v2185
        %v2249 = vpop.f32.mrf.mxu0
        %v2250 = vadd.f32 %v2137, %v2249
        %2251 = vmatmul.f32.gmra.mxu0 %v2188
        %v2252 = vpop.f32.mrf.mxu0
        %v2253 = vadd.f32 %v2140, %v2252
        %2254 = vmatmul.f32.gmra.mxu0 %v2191
        %v2255 = vpop.f32.mrf.mxu0
        %v2256 = vadd.f32 %v2143, %v2255
        %2257 = vmatmul.f32.gmra.mxu0 %v2194
        %v2258 = vpop.f32.mrf.mxu0
        %v2259 = vadd.f32 %v2146, %v2258
        %2260 = vmatmul.f32.gmra.mxu0 %v2197
        %v2261 = vpop.f32.mrf.mxu0
        %v2262 = vadd.f32 %v2149, %v2261
        %2263 = vmatmul.f32.gmra.mxu0 %v2200
        %v2264 = vpop.f32.mrf.mxu0
        %v2265 = vadd.f32 %v2152, %v2264
        %2266 = vmatmul.f32.gmra.mxu0 %v2203
        %v2267 = vpop.f32.mrf.mxu0
        %v2268 = vadd.f32 %v2155, %v2267
        %2269 = vmatmul.f32.gmra.mxu0 %v2206
        %v2270 = vpop.f32.mrf.mxu0
        %v2271 = vadd.f32 %v2158, %v2270
        %2272 = vmatmul.f32.gmra.mxu0 %v2209
        %v2273 = vpop.f32.mrf.mxu0
        %v2274 = vadd.f32 %v2161, %v2273
        %2275 = vmatmul.f32.gmra.mxu0 %v2212
        %v2276 = vpop.f32.mrf.mxu0
        %v2277 = vadd.f32 %v2164, %v2276
        %2278 = vmatmul.f32.gmra.mxu0 %v2215
        %v2279 = vpop.f32.mrf.mxu0
        %v2280 = vadd.f32 %v2167, %v2279
        %2281 = vmatmul.f32.gmra.mxu0 %v2218
        %v2282 = vpop.f32.mrf.mxu0
        %v2283 = vadd.f32 %v2170, %v2282
        %2284 = vmatmul.f32.gmra.mxu0 %v2221
        %v2285 = vpop.f32.mrf.mxu0
        %v2286 = vadd.f32 %v2173, %v2285
        %2287 = vdwg.mxu0
        %v2288 = vld [vmem:[%s8] sm:$0x1]
        %v2290 = vperm.slane %v2288, 0
        %v2292 = vadd.f32 %v2241, %v2290
        %v2293 = vadd.f32 %v2244, %v2290
        %v2294 = vadd.f32 %v2247, %v2290
        %v2295 = vadd.f32 %v2250, %v2290
        %v2296 = vadd.f32 %v2253, %v2290
        %v2297 = vadd.f32 %v2256, %v2290
        %v2298 = vadd.f32 %v2259, %v2290
        %v2299 = vadd.f32 %v2262, %v2290
        %v2300 = vadd.f32 %v2265, %v2290
        %v2301 = vadd.f32 %v2268, %v2290
        %v2302 = vadd.f32 %v2271, %v2290
        %v2303 = vadd.f32 %v2274, %v2290
        %v2304 = vadd.f32 %v2277, %v2290
        %v2305 = vadd.f32 %v2280, %v2290
        %v2306 = vadd.f32 %v2283, %v2290
        %v2307 = vadd.f32 %v2286, %v2290
        %2308 = vst [vmem:[%s449] sm:$0xff] %v2292
        %2309 = vst [vmem:[%s449 + $0x8] sm:$0xff] %v2293
        %2310 = vst [vmem:[%s449 + $0x10] sm:$0xff] %v2294
        %2311 = vst [vmem:[%s449 + $0x18] sm:$0xff] %v2295
        %2312 = vst [vmem:[%s449 + $0x20] sm:$0xff] %v2296
        %2313 = vst [vmem:[%s449 + $0x28] sm:$0xff] %v2297
        %2314 = vst [vmem:[%s449 + $0x30] sm:$0xff] %v2298
        %2315 = vst [vmem:[%s449 + $0x38] sm:$0xff] %v2299
        %2316 = vst [vmem:[%s449 + $0x40] sm:$0xff] %v2300
        %2317 = vst [vmem:[%s449 + $0x48] sm:$0xff] %v2301
        %2318 = vst [vmem:[%s449 + $0x50] sm:$0xff] %v2302
        %2319 = vst [vmem:[%s449 + $0x58] sm:$0xff] %v2303
        %2320 = vst [vmem:[%s449 + $0x60] sm:$0xff] %v2304
        %2321 = vst [vmem:[%s449 + $0x68] sm:$0xff] %v2305
        %2322 = vst [vmem:[%s449 + $0x70] sm:$0xff] %v2306
        %2323 = vst [vmem:[%s449 + $0x78] sm:$0xff] %v2307
        %s2324 = sand.u32 %s235, 1
        %s2325 = scalar_lea.sflag [#allocation4], %s2324
        %s2326 = sand.u32 %s235, 1
        %s2327 = smul.addr %s2326, 128
        %s2328 = scalar_lea.vmem [#allocation11], %s2327
        %s2329 = sand.u32 %s261, 1
        %s2330 = scalar_lea.sflag [#allocation13], %s2329
        %s2331 = sand.u32 %s261, 1
        %s2332 = smul.addr %s2331, 256
        %s2333 = scalar_lea.vmem [#allocation12], %s2332
        // Predicated region
        $region77: #{tpu_custom_call.1} parent=55 // pred_check
          %p2334 = pneg %p245
        $region78: #{tpu_custom_call.1} parent=55 // pred_check_branch
          %2336 = sbr.rel (%p2334) target = $region80
        $region79: #{tpu_custom_call.1} parent=55 // pred_region
          %2338 = vsyncadd %s2325, 0
          %s2339 = smul.addr %s33, 16
          %s2340 = smul.addr %s2339, 8
          %s2341 = scalar_lea.hbm %s9, %s2340
          %s2342 = sshll.u32 %s2328, 4
          %s2343 = int_to_ptr.vmem [resolvable:$true] %s2342
          %s2344 = sshll.u32 %s2341, 4
          %s2345 = int_to_ptr.hbm [resolvable:$true] %s2344
          %2350 = dma.vmem_to_hbm [thread:$0]  %s2343, 2048, %s2345, %s2325, 128, 128, 8
        $region80: #{tpu_custom_call.1} parent=55 // pred_fallthru
          _
        // Predicated region
        $region81: #{tpu_custom_call.1} parent=55 // pred_check
          %p2351 = pneg %p271
        $region82: #{tpu_custom_call.1} parent=55 // pred_check_branch
          %2353 = sbr.rel (%p2351) target = $region84
        $region83: #{tpu_custom_call.1} parent=55 // pred_region
          %2355 = vsyncadd %s2330, 0
          %s2356 = smul.addr %s33, 32
          %s2357 = smul.addr %s2356, 8
          %s2358 = scalar_lea.hbm %s10, %s2357
          %s2359 = sshll.u32 %s2333, 4
          %s2360 = int_to_ptr.vmem [resolvable:$true] %s2359
          %s2361 = sshll.u32 %s2358, 4
          %s2362 = int_to_ptr.hbm [resolvable:$true] %s2361
          %2367 = dma.vmem_to_hbm [thread:$0]  %s2360, 4096, %s2362, %s2330, 128, 128, 8
        $region84: #{tpu_custom_call.1} parent=55 // pred_fallthru
          _
      $region56: #{tpu_custom_call.1} parent=5 // pred_fallthru
        _
      %p2368 = scmp.le.s32.totalorder 2, %s28
      // Predicated region
      $region85: #{tpu_custom_call.1} parent=5 // pred_check
        %p2369 = pneg %p2368
      $region86: #{tpu_custom_call.1} parent=5 // pred_check_branch
        %2371 = sbr.rel (%p2369) target = $region88
      $region87: #{tpu_custom_call.1} parent=5 // pred_region
        %s2372 = ssub.s32 %s28, 2
        // Predicated region
        $region89: #{tpu_custom_call.1} parent=87 // pred_check
          %p2373 = pneg %p251
        $region90: #{tpu_custom_call.1} parent=87 // pred_check_branch
          %2375 = sbr.rel (%p2373) target = $region92
        $region91: #{tpu_custom_call.1} parent=87 // pred_region
          %s2376 = sand.u32 %s236, 1
          %s2377 = scalar_lea.sflag [#allocation4], %s2376
          %s2378 = sand.u32 %s236, 1
          %s2379 = smul.addr %s2378, 128
          %s2380 = scalar_lea.vmem [#allocation11], %s2379
          %2382 = dma.done %s2377, 2048
        $region92: #{tpu_custom_call.1} parent=87 // pred_fallthru
          _
        // Predicated region
        $region93: #{tpu_custom_call.1} parent=87 // pred_check
          %p2383 = pneg %p277
        $region94: #{tpu_custom_call.1} parent=87 // pred_check_branch
          %2385 = sbr.rel (%p2383) target = $region96
        $region95: #{tpu_custom_call.1} parent=87 // pred_region
          %s2386 = sand.u32 %s262, 1
          %s2387 = scalar_lea.sflag [#allocation13], %s2386
          %s2388 = sand.u32 %s262, 1
          %s2389 = smul.addr %s2388, 256
          %s2390 = scalar_lea.vmem [#allocation12], %s2389
          %2392 = dma.done %s2387, 4096
        $region96: #{tpu_custom_call.1} parent=87 // pred_fallthru
          _
      $region88: #{tpu_custom_call.1} parent=5 // pred_fallthru
        _
    $region6: #{tpu_custom_call.1} parent=1 // loop_footer
      %s32 = sadd.s32 1, %s28
    $region7: #{tpu_custom_call.1} parent=1 // loop_footer_branch
      %27 = sbr.rel target = $region3
    $region8: #{tpu_custom_call.1} parent=1 // loop_exit
      _
    %2393 = vsyncpa [#allocation3], 1
    %s2394 = scalar_lea.sflag [#allocation3], 1
    %2395 = vsyncpa %s2394, 1
    %2396 = vsyncpa [#allocation6], 1
    %2397 = vsyncpa [#allocation9], 1
    %2398 = vsyncpa [#allocation4], 1
    %s2399 = scalar_lea.sflag [#allocation4], 1
    %2400 = vsyncpa %s2399, 1
    %2401 = vsyncpa [#allocation13], 1
    %s2402 = scalar_lea.sflag [#allocation13], 1
    %2403 = vsyncpa %s2402, 1

</llo_original>
